<compile_context>
chip_gen: v6e
topology: v6e:2x2x1
jax: 0.10.0
libtpu: 0.0.40
codegen_flags: <defaults>
</compile_context>

<pallas_src>
import functools

import numpy as np
import jax
import jax.numpy as jnp
from jax.experimental import pallas as pl
from jax.experimental.pallas import tpu as pltpu

LN_EPS = 1e-5


def _layer_norm(x, g, b):
    mu = jnp.mean(x, axis=-1, keepdims=True)
    var = jnp.mean(jnp.square(x - mu), axis=-1, keepdims=True)
    return (x - mu) * jax.lax.rsqrt(var + LN_EPS) * g + b


# ---------------------------------------------------------------------------
# Fused kernel body: one encoder layer per grid step, activation resident in VMEM scratch
# ---------------------------------------------------------------------------
def fused_transformer_kernel(x_ref,
                             w_in_ref, b_in_ref, w_out_ref, b_out_ref,
                             g1_ref, be1_ref,
                             w1_ref, bf1_ref, w2_ref, bf2_ref,
                             g2_ref, be2_ref,
                             wp_ref, bp_ref,
                             o_ref, h_ref, *, nhead):
    bt, S, D = x_ref.shape                      # (batch_tile, seq, d_model)
    R = bt * S
    H = nhead
    hd = D // H
    l = pl.program_id(1)
    n_layers = pl.num_programs(1)

    # First layer of this batch tile: load the activation slab into persistent scratch.
    @pl.when(l == 0)
    def _():
        h_ref[...] = x_ref[...].reshape(R, D)

    h = h_ref[...]                              # (R, D) f32, resident across the layer axis
    hb = h.astype(jnp.bfloat16)

    # ----- fused QKV projection: one lane-dense (R, D) @ (D, 3D) MXU matmul -----
    # (1/sqrt(head_dim) is pre-folded into the Q third of w_in / b_in.)
    qkv = jnp.dot(hb, w_in_ref[0], preferred_element_type=jnp.float32) + b_in_ref[0]

    # ----- multi-head self-attention -----
    # Heads are static lane slices of the fused QKV output (lane-aligned once hd % 128 == 0
    # at production shapes); scores / AV are einsums batched over the batch-tile dim.
    # Head merge + out-projection accumulate directly into one (R, D) f32 value:
    #   sum_h (ao_h @ W_out[h*hd:(h+1)*hd, :])  ==  concat_h(ao_h) @ W_out
    # so no (H, S, D) intermediate is ever materialized.
    attn = jnp.zeros((R, D), dtype=jnp.float32)
    for hh in range(H):
        lo = hh * hd
        q = qkv[:, lo:lo + hd].reshape(bt, S, hd).astype(jnp.bfloat16)
        k = qkv[:, D + lo:D + lo + hd].reshape(bt, S, hd).astype(jnp.bfloat16)
        v = qkv[:, 2 * D + lo:2 * D + lo + hd].reshape(bt, S, hd).astype(jnp.bfloat16)

        s = jnp.einsum('bqd,bkd->bqk', q, k,
                       preferred_element_type=jnp.float32)            # (bt, S, S) f32
        s = s - jnp.max(s, axis=-1, keepdims=True)
        p = jnp.exp(s)
        p = p * pl.reciprocal(jnp.sum(p, axis=-1, keepdims=True), approx=False)

        ao = jnp.einsum('bqk,bkd->bqd', p.astype(jnp.bfloat16), v,
                        preferred_element_type=jnp.float32)            # (bt, S, hd) f32
        attn = attn + jnp.dot(ao.reshape(R, hd).astype(jnp.bfloat16),
                              w_out_ref[0, lo:lo + hd, :],
                              preferred_element_type=jnp.float32)
    attn = attn + b_out_ref[0]

    # ----- residual + LayerNorm1 (f32) -----
    h1 = _layer_norm(h + attn, g1_ref[0], be1_ref[0])

    # ----- feed-forward (relu) + residual + LayerNorm2 -----
    f = jnp.dot(h1.astype(jnp.bfloat16), w1_ref[0],
                preferred_element_type=jnp.float32) + bf1_ref[0]
    f = jnp.maximum(f, 0.0)
    f = jnp.dot(f.astype(jnp.bfloat16), w2_ref[0],
                preferred_element_type=jnp.float32) + bf2_ref[0]
    h2 = _layer_norm(h1 + f, g2_ref[0], be2_ref[0])
    h_ref[...] = h2

    # Last layer: fused final projection + the only HBM store of this batch tile.
    @pl.when(l == n_layers - 1)
    def _():
        y = jnp.dot(h2.astype(jnp.bfloat16), wp_ref[...],
                    preferred_element_type=jnp.float32) + bp_ref[...]
        o_ref[...] = y.reshape(bt, S, D).astype(o_ref.dtype)


# ---------------------------------------------------------------------------
# Host-side parameter prep: stack layers on a leading axis, fold q-scale, cast to bf16
# ---------------------------------------------------------------------------
def prepare_fused_params(params, nhead):
    layers = params["layers"]
    D = layers[0]["w_in_t"].shape[0]
    hd = D // nhead
    scale = 1.0 / float(np.sqrt(hd))
    # Fold 1/sqrt(head_dim) into the Q third of the fused QKV weight & bias.
    qscale = jnp.concatenate([jnp.full((1, D), scale, jnp.float32),
                              jnp.ones((1, 2 * D), jnp.float32)], axis=1)

    def per_layer(lp):
        return dict(
            w_in=lp["w_in_t"] * qscale, b_in=lp["b_in"] * qscale,
            w_out=lp["w_out_t"], b_out=lp["b_out"],
            g1=lp["g1"], be1=lp["be1"],
            w1=lp["w1_t"], bf1=lp["bf1"], w2=lp["w2_t"], bf2=lp["bf2"],
            g2=lp["g2"], be2=lp["be2"],
        )

    per = [per_layer(lp) for lp in layers]
    stack = lambda name: jnp.stack([p[name] for p in per], axis=0)
    bf16 = lambda a: a.astype(jnp.bfloat16)
    return dict(
        w_in=bf16(stack("w_in")), b_in=stack("b_in"),
        w_out=bf16(stack("w_out")), b_out=stack("b_out"),
        g1=stack("g1"), be1=stack("be1"),
        w1=bf16(stack("w1")), bf1=stack("bf1"),
        w2=bf16(stack("w2")), bf2=stack("bf2"),
        g2=stack("g2"), be2=stack("be2"),
        wp=bf16(params["wp_t"]), bp=params["bp"],
    )


_PER_LAYER = ["w_in", "b_in", "w_out", "b_out", "g1", "be1",
              "w1", "bf1", "w2", "bf2", "g2", "be2"]
_CONST = ["wp", "bp"]


def _layer_spec(arr):
    # Stream one layer's slice (1, ...) per grid step along the layer axis.
    blk = (1,) + tuple(arr.shape[1:])
    n = arr.ndim - 1
    return pl.BlockSpec(blk, lambda i, l, _n=n: (l,) + (0,) * _n)


def _const_spec(arr):
    n = arr.ndim
    return pl.BlockSpec(tuple(arr.shape), lambda i, l, _n=n: (0,) * _n)


def _nbytes(a):
    return int(np.prod(a.shape)) * a.dtype.itemsize


def _pick_num_tiles(B, S):
    # >=2 "parallel" steps keeps both v7x TensorCores busy; prefer more tiles only while the
    # per-step matmul M-dim (b_tile*S) stays >= 256 rows (v6e/v7x MXU-friendly).
    for t in (8, 4, 2):
        if B % t == 0 and (B // t) * S >= 256:
            return t
    return 2 if (B % 2 == 0 and B >= 2) else 1


# ---------------------------------------------------------------------------
# Wrapper: single pallas_call, grid = (batch_tiles, num_layers)
# ---------------------------------------------------------------------------
def adaptive_transformer_forward(x_sbd, params, nhead):
    S, B, D = x_sbd.shape
    assert D % nhead == 0, "d_model must be divisible by nhead"
    x = jnp.transpose(x_sbd, (1, 0, 2)).astype(jnp.float32)     # (S,B,D) -> (B,S,D)

    fp = prepare_fused_params(params, nhead)
    L = int(fp["w_in"].shape[0])

    num_tiles = _pick_num_tiles(B, S)
    b_tile = B // num_tiles

    per_layer = [fp[n] for n in _PER_LAYER]
    consts = [fp[n] for n in _CONST]

    in_specs = [pl.BlockSpec((b_tile, S, D), lambda i, l: (i, 0, 0))]
    in_specs += [_layer_spec(w) for w in per_layer]
    in_specs += [_const_spec(w) for w in consts]

    # Explicit VMEM budget: double-buffered streamed layer weights + double-buffered x / out
    # tiles + activation scratch + headroom for in-kernel temporaries (QKV, scores, FFN),
    # clamped to the detected chip's VMEM capacity (64 MiB v7x / 128 MiB v5e-v6e).
    layer_bytes = sum(_nbytes(w) for w in per_layer) // L
    const_bytes = sum(_nbytes(w) for w in consts)
    tile_bytes = b_tile * S * D * 4
    tmp_bytes = (b_tile * S * 3 * D * 4          # fused QKV output (f32)
                 + 2 * b_tile * S * S * 4        # per-head scores + probs (f32)
                 + b_tile * S * 4 * D * 4)       # FFN intermediate (f32)
    est = 2 * layer_bytes + const_bytes + 4 * tile_bytes + tile_bytes + 4 * tmp_bytes
    try:
        vmem_cap = int(pltpu.get_tpu_info().vmem_capacity_bytes)
    except Exception:
        vmem_cap = 64 * 1024 * 1024              # conservative: v7x per-TC VMEM
    vmem_limit = int(min(max(est, 32 * 1024 * 1024), int(0.85 * vmem_cap)))

    kernel = functools.partial(fused_transformer_kernel, nhead=nhead)
    out = pl.pallas_call(
        kernel,
        out_shape=jax.ShapeDtypeStruct((B, S, D), jnp.float32),
        grid=(num_tiles, L),
        in_specs=in_specs,
        out_specs=pl.BlockSpec((b_tile, S, D), lambda i, l: (i, 0, 0)),
        scratch_shapes=[pltpu.VMEM((b_tile * S, D), jnp.float32)],
        compiler_params=pltpu.CompilerParams(
            dimension_semantics=("parallel", "arbitrary"),
            vmem_limit_bytes=vmem_limit),
    )(x, *per_layer, *consts)

    return jnp.transpose(out, (1, 0, 2))                        # back to (S, B, D)


# ---------------------------------------------------------------------------
# Deterministic parameter init (PyTorch-equivalent layout, weights pre-transposed (in, out))
# ---------------------------------------------------------------------------
def init_params(key, d_model, nhead, num_layers):
    D = d_model

    def nrm(k, shape, scale=0.05):
        return (scale * jax.random.normal(k, shape)).astype(jnp.float32)

    layers = []
    for i in range(num_layers):
        keys = jax.random.split(jax.random.fold_in(key, i), 8)
        layers.append(dict(
            w_in_t=nrm(keys[0], (D, 3 * D)),        # in_proj_weight.T
            b_in=nrm(keys[1], (1, 3 * D)),
            w_out_t=nrm(keys[2], (D, D)),           # out_proj.weight.T
            b_out=nrm(keys[3], (1, D)),
            g1=jnp.ones((1, D), jnp.float32),
            be1=jnp.zeros((1, D), jnp.float32),
            w1_t=nrm(keys[4], (D, 4 * D)),          # linear1.weight.T
            bf1=nrm(keys[5], (1, 4 * D)),
            w2_t=nrm(keys[6], (4 * D, D)),          # linear2.weight.T
            bf2=nrm(keys[7], (1, D)),
            g2=jnp.ones((1, D), jnp.float32),
            be2=jnp.zeros((1, D), jnp.float32),
        ))
    kp1, kp2 = jax.random.split(jax.random.fold_in(key, 999))
    return dict(layers=layers, wp_t=nrm(kp1, (D, D)), bp=nrm(kp2, (1, D)))


# ---------------------------------------------------------------------------
# Pure-JAX f32 reference (same math as the PyTorch module, no Pallas)
# ---------------------------------------------------------------------------
def ref_forward(x_sbd, params, nhead):
    x = jnp.transpose(x_sbd, (1, 0, 2))
    B, S, D = x.shape
    hd = D // nhead
    for lp in params["layers"]:
        qkv = x @ lp["w_in_t"] + lp["b_in"]
        q = qkv[..., :D] * (1.0 / float(np.sqrt(hd)))
        k = qkv[..., D:2 * D]
        v = qkv[..., 2 * D:]
        q = q.reshape(B, S, nhead, hd)
        k = k.reshape(B, S, nhead, hd)
        v = v.reshape(B, S, nhead, hd)
        s = jnp.einsum('bqhd,bkhd->bhqk', q, k)
        p = jax.nn.softmax(s, axis=-1)
        a = jnp.einsum('bhqk,bkhd->bqhd', p, v).reshape(B, S, D)
        a = a @ lp["w_out_t"] + lp["b_out"]
        x = _layer_norm(x + a, lp["g1"], lp["be1"])
        f = jnp.maximum(x @ lp["w1_t"] + lp["bf1"], 0.0)
        f = f @ lp["w2_t"] + lp["bf2"]
        x = _layer_norm(x + f, lp["g2"], lp["be2"])
    x = x @ params["wp_t"] + params["bp"]
    return jnp.transpose(x, (1, 0, 2))


if __name__ == "__main__":
    d_model, nhead, num_layers = 32, 4, 2
    S, B = 8, 2

    key = jax.random.PRNGKey(0)
    kx, kp = jax.random.split(key)
    x = jax.random.normal(kx, (S, B, d_model), dtype=jnp.float32)   # (seq, batch, d_model)
    params = init_params(kp, d_model, nhead, num_layers)

    out = adaptive_transformer_forward(x, params, nhead)
    out = jax.block_until_ready(out)
    assert out.shape == (S, B, d_model)

    ref = jax.block_until_ready(ref_forward(x, params, nhead))
    # Kernel uses bf16 matmul operands (f32 accumulate); softmax reciprocal is exact, so the
    # remaining tolerance vs. the f32 reference is bf16-rounding dominated.
    np.testing.assert_allclose(np.asarray(out), np.asarray(ref), rtol=5e-2, atol=5e-2)

    print("KERNEL_OK")
</pallas_src>

<mosaic_0001>
module attributes {stable_mosaic.version = 11 : i64} {
  func.func @fused_transformer_kernel(%arg0: i32, %arg1: i32, %arg2: memref<1x8x32xf32, #tpu.memory_space<vmem>>, %arg3: memref<1x32x96xbf16, #tpu.memory_space<vmem>>, %arg4: memref<1x1x96xf32, #tpu.memory_space<vmem>>, %arg5: memref<1x32x32xbf16, #tpu.memory_space<vmem>>, %arg6: memref<1x1x32xf32, #tpu.memory_space<vmem>>, %arg7: memref<1x1x32xf32, #tpu.memory_space<vmem>>, %arg8: memref<1x1x32xf32, #tpu.memory_space<vmem>>, %arg9: memref<1x32x128xbf16, #tpu.memory_space<vmem>>, %arg10: memref<1x1x128xf32, #tpu.memory_space<vmem>>, %arg11: memref<1x128x32xbf16, #tpu.memory_space<vmem>>, %arg12: memref<1x1x32xf32, #tpu.memory_space<vmem>>, %arg13: memref<1x1x32xf32, #tpu.memory_space<vmem>>, %arg14: memref<1x1x32xf32, #tpu.memory_space<vmem>>, %arg15: memref<32x32xbf16, #tpu.memory_space<vmem>>, %arg16: memref<1x32xf32, #tpu.memory_space<vmem>>, %arg17: memref<1x8x32xf32, #tpu.memory_space<vmem>>, %arg18: memref<8x32xf32, #tpu.memory_space<vmem>>) attributes {dimension_semantics = [#tpu.dimension_semantics<parallel>, #tpu.dimension_semantics<arbitrary>], iteration_bounds = array<i64: 2, 2>, scalar_prefetch = 0 : i64, scratch_operands = 1 : i64, tpu.core_type = #tpu.core_type<tc>, window_params = [{transform_indices = @transform_0, window_bounds = array<i64: 1, 8, 32>}, {transform_indices = @transform_1, window_bounds = array<i64: 1, 32, 96>}, {transform_indices = @transform_2, window_bounds = array<i64: 1, 1, 96>}, {transform_indices = @transform_3, window_bounds = array<i64: 1, 32, 32>}, {transform_indices = @transform_4, window_bounds = array<i64: 1, 1, 32>}, {transform_indices = @transform_5, window_bounds = array<i64: 1, 1, 32>}, {transform_indices = @transform_6, window_bounds = array<i64: 1, 1, 32>}, {transform_indices = @transform_7, window_bounds = array<i64: 1, 32, 128>}, {transform_indices = @transform_8, window_bounds = array<i64: 1, 1, 128>}, {transform_indices = @transform_9, window_bounds = array<i64: 1, 128, 32>}, {transform_indices = @transform_10, window_bounds = array<i64: 1, 1, 32>}, {transform_indices = @transform_11, window_bounds = array<i64: 1, 1, 32>}, {transform_indices = @transform_12, window_bounds = array<i64: 1, 1, 32>}, {pipeline_mode = #tpu.pipeline_mode<synchronous>, transform_indices = @transform_13, window_bounds = array<i64: 32, 32>}, {pipeline_mode = #tpu.pipeline_mode<synchronous>, transform_indices = @transform_14, window_bounds = array<i64: 1, 32>}, {transform_indices = @transform_15, window_bounds = array<i64: 1, 8, 32>}]} {
    %c0_i32 = arith.constant 0 : i32
    %0 = arith.cmpi eq, %arg1, %c0_i32 : i32
    %1 = arith.extui %0 : i1 to i32
    %c0_i32_0 = arith.constant 0 : i32
    %2 = arith.cmpi ne, %1, %c0_i32_0 : i32
    scf.if %2 {
      %c0_81 = arith.constant 0 : index
      %c0_82 = arith.constant 0 : index
      %c0_83 = arith.constant 0 : index
      %205 = vector.load %arg2[%c0_81, %c0_82, %c0_83] : memref<1x8x32xf32, #tpu.memory_space<vmem>>, vector<1x8x32xf32>
      %206 = vector.shape_cast %205 : vector<1x8x32xf32> to vector<8x32xf32>
      %c0_84 = arith.constant 0 : index
      %c0_85 = arith.constant 0 : index
      %207 = vector.load %arg18[%c0_84, %c0_85] : memref<8x32xf32, #tpu.memory_space<vmem>>, vector<8x32xf32>
      tpu.vector_store %arg18[%c0_84, %c0_85], %206 {strides = array<i32>} : memref<8x32xf32, #tpu.memory_space<vmem>>, vector<8x32xf32>,
    } else {
    }
    %c0 = arith.constant 0 : index
    %c0_1 = arith.constant 0 : index
    %3 = vector.load %arg18[%c0, %c0_1] : memref<8x32xf32, #tpu.memory_space<vmem>>, vector<8x32xf32>
    %4 = arith.truncf %3 : vector<8x32xf32> to vector<8x32xbf16>
    %c0_2 = arith.constant 0 : index
    %c0_3 = arith.constant 0 : index
    %c0_4 = arith.constant 0 : index
    %5 = vector.load %arg3[%c0_2, %c0_3, %c0_4] : memref<1x32x96xbf16, #tpu.memory_space<vmem>>, vector<1x32x96xbf16>
    %6 = vector.shape_cast %5 : vector<1x32x96xbf16> to vector<32x96xbf16>
    %cst = arith.constant dense<0.000000e+00> : vector<8x96xf32>
    %7 = tpu.matmul %4, %6, %cst {dimension_numbers = #tpu.dot_dimension_numbers<[1], [0], [0], [1], [0, 0, 1, 1], [], []>} : vector<8x32xbf16>, vector<32x96xbf16>, vector<8x96xf32> -> vector<8x96xf32>
    %c0_5 = arith.constant 0 : index
    %c0_6 = arith.constant 0 : index
    %c0_7 = arith.constant 0 : index
    %8 = vector.load %arg4[%c0_5, %c0_6, %c0_7] : memref<1x1x96xf32, #tpu.memory_space<vmem>>, vector<1x1x96xf32>
    %9 = vector.shape_cast %8 : vector<1x1x96xf32> to vector<1x96xf32>
    %10 = vector.broadcast %9 : vector<1x96xf32> to vector<8x96xf32>
    %11 = arith.addf %7, %10 : vector<8x96xf32>
    %cst_8 = arith.constant 0.000000e+00 : f32
    %12 = vector.broadcast %cst_8 : f32 to vector<8x32xf32>
    %13 = vector.extract_strided_slice %11 {offsets = [0, 0], sizes = [8, 8], strides = [1, 1]} : vector<8x96xf32> to vector<8x8xf32>
    %14 = vector.shape_cast %13 : vector<8x8xf32> to vector<1x8x8xf32>
    %15 = arith.truncf %14 : vector<1x8x8xf32> to vector<1x8x8xbf16>
    %16 = vector.extract_strided_slice %11 {offsets = [0, 32], sizes = [8, 8], strides = [1, 1]} : vector<8x96xf32> to vector<8x8xf32>
    %17 = vector.shape_cast %16 : vector<8x8xf32> to vector<1x8x8xf32>
    %18 = arith.truncf %17 : vector<1x8x8xf32> to vector<1x8x8xbf16>
    %19 = vector.extract_strided_slice %11 {offsets = [0, 64], sizes = [8, 8], strides = [1, 1]} : vector<8x96xf32> to vector<8x8xf32>
    %20 = vector.shape_cast %19 : vector<8x8xf32> to vector<1x8x8xf32>
    %21 = arith.truncf %20 : vector<1x8x8xf32> to vector<1x8x8xbf16>
    "tpu.trace_start"() <{level = 10 : i32, message = "bqd,bkd->bqk"}> : () -> ()
    %cst_9 = arith.constant dense<0.000000e+00> : vector<1x8x8xf32>
    %22 = tpu.matmul %15, %18, %cst_9 {dimension_numbers = #tpu.dot_dimension_numbers<[2], [2], [1], [1], [0, 0, 0, 1, 1, 1], [0], [0]>} : vector<1x8x8xbf16>, vector<1x8x8xbf16>, vector<1x8x8xf32> -> vector<1x8x8xf32>
    "tpu.trace_stop"() : () -> ()
    %cst_10 = arith.constant dense<0xFF800000> : vector<1x8xf32>
    %23 = vector.multi_reduction <maximumf>, %22, %cst_10 [2] : vector<1x8x8xf32> to vector<1x8xf32>
    %24 = vector.shape_cast %23 : vector<1x8xf32> to vector<1x8x1xf32>
    %25 = vector.broadcast %24 : vector<1x8x1xf32> to vector<1x8x8xf32>
    %26 = arith.subf %22, %25 : vector<1x8x8xf32>
    %27 = math.exp %26 : vector<1x8x8xf32>
    %cst_11 = arith.constant dense<0.000000e+00> : vector<1x8xf32>
    %28 = vector.multi_reduction <add>, %27, %cst_11 [2] : vector<1x8x8xf32> to vector<1x8xf32>
    %29 = vector.shape_cast %28 : vector<1x8xf32> to vector<1x8x1xf32>
    %30 = tpu.reciprocal %29 : vector<1x8x1xf32> -> vector<1x8x1xf32>
    %31 = vector.broadcast %30 : vector<1x8x1xf32> to vector<1x8x8xf32>
    %32 = arith.mulf %27, %31 : vector<1x8x8xf32>
    %33 = arith.truncf %32 : vector<1x8x8xf32> to vector<1x8x8xbf16>
    "tpu.trace_start"() <{level = 10 : i32, message = "bqk,bkd->bqd"}> : () -> ()
    %cst_12 = arith.constant dense<0.000000e+00> : vector<1x8x8xf32>
    %34 = tpu.matmul %33, %21, %cst_12 {dimension_numbers = #tpu.dot_dimension_numbers<[2], [1], [1], [2], [0, 0, 0, 1, 1, 2], [0], [0]>} : vector<1x8x8xbf16>, vector<1x8x8xbf16>, vector<1x8x8xf32> -> vector<1x8x8xf32>
    "tpu.trace_stop"() : () -> ()
    %35 = vector.shape_cast %34 : vector<1x8x8xf32> to vector<8x8xf32>
    %36 = arith.truncf %35 : vector<8x8xf32> to vector<8x8xbf16>
    %c0_13 = arith.constant 0 : index
    %c0_14 = arith.constant 0 : index
    %c0_15 = arith.constant 0 : index
    %37 = vector.load %arg5[%c0_13, %c0_14, %c0_15] : memref<1x32x32xbf16, #tpu.memory_space<vmem>>, vector<1x8x32xbf16>
    %38 = vector.shape_cast %37 : vector<1x8x32xbf16> to vector<8x32xbf16>
    %cst_16 = arith.constant dense<0.000000e+00> : vector<8x32xf32>
    %39 = tpu.matmul %36, %38, %cst_16 {dimension_numbers = #tpu.dot_dimension_numbers<[1], [0], [0], [1], [0, 0, 1, 1], [], []>} : vector<8x8xbf16>, vector<8x32xbf16>, vector<8x32xf32> -> vector<8x32xf32>
    %40 = arith.addf %12, %39 : vector<8x32xf32>
    %41 = vector.extract_strided_slice %11 {offsets = [0, 8], sizes = [8, 8], strides = [1, 1]} : vector<8x96xf32> to vector<8x8xf32>
    %42 = vector.shape_cast %41 : vector<8x8xf32> to vector<1x8x8xf32>
    %43 = arith.truncf %42 : vector<1x8x8xf32> to vector<1x8x8xbf16>
    %44 = vector.extract_strided_slice %11 {offsets = [0, 40], sizes = [8, 8], strides = [1, 1]} : vector<8x96xf32> to vector<8x8xf32>
    %45 = vector.shape_cast %44 : vector<8x8xf32> to vector<1x8x8xf32>
    %46 = arith.truncf %45 : vector<1x8x8xf32> to vector<1x8x8xbf16>
    %47 = vector.extract_strided_slice %11 {offsets = [0, 72], sizes = [8, 8], strides = [1, 1]} : vector<8x96xf32> to vector<8x8xf32>
    %48 = vector.shape_cast %47 : vector<8x8xf32> to vector<1x8x8xf32>
    %49 = arith.truncf %48 : vector<1x8x8xf32> to vector<1x8x8xbf16>
    "tpu.trace_start"() <{level = 10 : i32, message = "bqd,bkd->bqk"}> : () -> ()
    %cst_17 = arith.constant dense<0.000000e+00> : vector<1x8x8xf32>
    %50 = tpu.matmul %43, %46, %cst_17 {dimension_numbers = #tpu.dot_dimension_numbers<[2], [2], [1], [1], [0, 0, 0, 1, 1, 1], [0], [0]>} : vector<1x8x8xbf16>, vector<1x8x8xbf16>, vector<1x8x8xf32> -> vector<1x8x8xf32>
    "tpu.trace_stop"() : () -> ()
    %cst_18 = arith.constant dense<0xFF800000> : vector<1x8xf32>
    %51 = vector.multi_reduction <maximumf>, %50, %cst_18 [2] : vector<1x8x8xf32> to vector<1x8xf32>
    %52 = vector.shape_cast %51 : vector<1x8xf32> to vector<1x8x1xf32>
    %53 = vector.broadcast %52 : vector<1x8x1xf32> to vector<1x8x8xf32>
    %54 = arith.subf %50, %53 : vector<1x8x8xf32>
    %55 = math.exp %54 : vector<1x8x8xf32>
    %cst_19 = arith.constant dense<0.000000e+00> : vector<1x8xf32>
    %56 = vector.multi_reduction <add>, %55, %cst_19 [2] : vector<1x8x8xf32> to vector<1x8xf32>
    %57 = vector.shape_cast %56 : vector<1x8xf32> to vector<1x8x1xf32>
    %58 = tpu.reciprocal %57 : vector<1x8x1xf32> -> vector<1x8x1xf32>
    %59 = vector.broadcast %58 : vector<1x8x1xf32> to vector<1x8x8xf32>
    %60 = arith.mulf %55, %59 : vector<1x8x8xf32>
    %61 = arith.truncf %60 : vector<1x8x8xf32> to vector<1x8x8xbf16>
    "tpu.trace_start"() <{level = 10 : i32, message = "bqk,bkd->bqd"}> : () -> ()
    %cst_20 = arith.constant dense<0.000000e+00> : vector<1x8x8xf32>
    %62 = tpu.matmul %61, %49, %cst_20 {dimension_numbers = #tpu.dot_dimension_numbers<[2], [1], [1], [2], [0, 0, 0, 1, 1, 2], [0], [0]>} : vector<1x8x8xbf16>, vector<1x8x8xbf16>, vector<1x8x8xf32> -> vector<1x8x8xf32>
    "tpu.trace_stop"() : () -> ()
    %63 = vector.shape_cast %62 : vector<1x8x8xf32> to vector<8x8xf32>
    %64 = arith.truncf %63 : vector<8x8xf32> to vector<8x8xbf16>
    %c0_21 = arith.constant 0 : index
    %c8 = arith.constant 8 : index
    %c0_22 = arith.constant 0 : index
    %65 = vector.load %arg5[%c0_21, %c8, %c0_22] : memref<1x32x32xbf16, #tpu.memory_space<vmem>>, vector<1x8x32xbf16>
    %66 = vector.shape_cast %65 : vector<1x8x32xbf16> to vector<8x32xbf16>
    %cst_23 = arith.constant dense<0.000000e+00> : vector<8x32xf32>
    %67 = tpu.matmul %64, %66, %cst_23 {dimension_numbers = #tpu.dot_dimension_numbers<[1], [0], [0], [1], [0, 0, 1, 1], [], []>} : vector<8x8xbf16>, vector<8x32xbf16>, vector<8x32xf32> -> vector<8x32xf32>
    %68 = arith.addf %40, %67 : vector<8x32xf32>
    %69 = vector.extract_strided_slice %11 {offsets = [0, 16], sizes = [8, 8], strides = [1, 1]} : vector<8x96xf32> to vector<8x8xf32>
    %70 = vector.shape_cast %69 : vector<8x8xf32> to vector<1x8x8xf32>
    %71 = arith.truncf %70 : vector<1x8x8xf32> to vector<1x8x8xbf16>
    %72 = vector.extract_strided_slice %11 {offsets = [0, 48], sizes = [8, 8], strides = [1, 1]} : vector<8x96xf32> to vector<8x8xf32>
    %73 = vector.shape_cast %72 : vector<8x8xf32> to vector<1x8x8xf32>
    %74 = arith.truncf %73 : vector<1x8x8xf32> to vector<1x8x8xbf16>
    %75 = vector.extract_strided_slice %11 {offsets = [0, 80], sizes = [8, 8], strides = [1, 1]} : vector<8x96xf32> to vector<8x8xf32>
    %76 = vector.shape_cast %75 : vector<8x8xf32> to vector<1x8x8xf32>
    %77 = arith.truncf %76 : vector<1x8x8xf32> to vector<1x8x8xbf16>
    "tpu.trace_start"() <{level = 10 : i32, message = "bqd,bkd->bqk"}> : () -> ()
    %cst_24 = arith.constant dense<0.000000e+00> : vector<1x8x8xf32>
    %78 = tpu.matmul %71, %74, %cst_24 {dimension_numbers = #tpu.dot_dimension_numbers<[2], [2], [1], [1], [0, 0, 0, 1, 1, 1], [0], [0]>} : vector<1x8x8xbf16>, vector<1x8x8xbf16>, vector<1x8x8xf32> -> vector<1x8x8xf32>
    "tpu.trace_stop"() : () -> ()
    %cst_25 = arith.constant dense<0xFF800000> : vector<1x8xf32>
    %79 = vector.multi_reduction <maximumf>, %78, %cst_25 [2] : vector<1x8x8xf32> to vector<1x8xf32>
    %80 = vector.shape_cast %79 : vector<1x8xf32> to vector<1x8x1xf32>
    %81 = vector.broadcast %80 : vector<1x8x1xf32> to vector<1x8x8xf32>
    %82 = arith.subf %78, %81 : vector<1x8x8xf32>
    %83 = math.exp %82 : vector<1x8x8xf32>
    %cst_26 = arith.constant dense<0.000000e+00> : vector<1x8xf32>
    %84 = vector.multi_reduction <add>, %83, %cst_26 [2] : vector<1x8x8xf32> to vector<1x8xf32>
    %85 = vector.shape_cast %84 : vector<1x8xf32> to vector<1x8x1xf32>
    %86 = tpu.reciprocal %85 : vector<1x8x1xf32> -> vector<1x8x1xf32>
    %87 = vector.broadcast %86 : vector<1x8x1xf32> to vector<1x8x8xf32>
    %88 = arith.mulf %83, %87 : vector<1x8x8xf32>
    %89 = arith.truncf %88 : vector<1x8x8xf32> to vector<1x8x8xbf16>
    "tpu.trace_start"() <{level = 10 : i32, message = "bqk,bkd->bqd"}> : () -> ()
    %cst_27 = arith.constant dense<0.000000e+00> : vector<1x8x8xf32>
    %90 = tpu.matmul %89, %77, %cst_27 {dimension_numbers = #tpu.dot_dimension_numbers<[2], [1], [1], [2], [0, 0, 0, 1, 1, 2], [0], [0]>} : vector<1x8x8xbf16>, vector<1x8x8xbf16>, vector<1x8x8xf32> -> vector<1x8x8xf32>
    "tpu.trace_stop"() : () -> ()
    %91 = vector.shape_cast %90 : vector<1x8x8xf32> to vector<8x8xf32>
    %92 = arith.truncf %91 : vector<8x8xf32> to vector<8x8xbf16>
    %c0_28 = arith.constant 0 : index
    %c16 = arith.constant 16 : index
    %c0_29 = arith.constant 0 : index
    %93 = vector.load %arg5[%c0_28, %c16, %c0_29] : memref<1x32x32xbf16, #tpu.memory_space<vmem>>, vector<1x8x32xbf16>
    %94 = vector.shape_cast %93 : vector<1x8x32xbf16> to vector<8x32xbf16>
    %cst_30 = arith.constant dense<0.000000e+00> : vector<8x32xf32>
    %95 = tpu.matmul %92, %94, %cst_30 {dimension_numbers = #tpu.dot_dimension_numbers<[1], [0], [0], [1], [0, 0, 1, 1], [], []>} : vector<8x8xbf16>, vector<8x32xbf16>, vector<8x32xf32> -> vector<8x32xf32>
    %96 = arith.addf %68, %95 : vector<8x32xf32>
    %97 = vector.extract_strided_slice %11 {offsets = [0, 24], sizes = [8, 8], strides = [1, 1]} : vector<8x96xf32> to vector<8x8xf32>
    %98 = vector.shape_cast %97 : vector<8x8xf32> to vector<1x8x8xf32>
    %99 = arith.truncf %98 : vector<1x8x8xf32> to vector<1x8x8xbf16>
    %100 = vector.extract_strided_slice %11 {offsets = [0, 56], sizes = [8, 8], strides = [1, 1]} : vector<8x96xf32> to vector<8x8xf32>
    %101 = vector.shape_cast %100 : vector<8x8xf32> to vector<1x8x8xf32>
    %102 = arith.truncf %101 : vector<1x8x8xf32> to vector<1x8x8xbf16>
    %103 = vector.extract_strided_slice %11 {offsets = [0, 88], sizes = [8, 8], strides = [1, 1]} : vector<8x96xf32> to vector<8x8xf32>
    %104 = vector.shape_cast %103 : vector<8x8xf32> to vector<1x8x8xf32>
    %105 = arith.truncf %104 : vector<1x8x8xf32> to vector<1x8x8xbf16>
    "tpu.trace_start"() <{level = 10 : i32, message = "bqd,bkd->bqk"}> : () -> ()
    %cst_31 = arith.constant dense<0.000000e+00> : vector<1x8x8xf32>
    %106 = tpu.matmul %99, %102, %cst_31 {dimension_numbers = #tpu.dot_dimension_numbers<[2], [2], [1], [1], [0, 0, 0, 1, 1, 1], [0], [0]>} : vector<1x8x8xbf16>, vector<1x8x8xbf16>, vector<1x8x8xf32> -> vector<1x8x8xf32>
    "tpu.trace_stop"() : () -> ()
    %cst_32 = arith.constant dense<0xFF800000> : vector<1x8xf32>
    %107 = vector.multi_reduction <maximumf>, %106, %cst_32 [2] : vector<1x8x8xf32> to vector<1x8xf32>
    %108 = vector.shape_cast %107 : vector<1x8xf32> to vector<1x8x1xf32>
    %109 = vector.broadcast %108 : vector<1x8x1xf32> to vector<1x8x8xf32>
    %110 = arith.subf %106, %109 : vector<1x8x8xf32>
    %111 = math.exp %110 : vector<1x8x8xf32>
    %cst_33 = arith.constant dense<0.000000e+00> : vector<1x8xf32>
    %112 = vector.multi_reduction <add>, %111, %cst_33 [2] : vector<1x8x8xf32> to vector<1x8xf32>
    %113 = vector.shape_cast %112 : vector<1x8xf32> to vector<1x8x1xf32>
    %114 = tpu.reciprocal %113 : vector<1x8x1xf32> -> vector<1x8x1xf32>
    %115 = vector.broadcast %114 : vector<1x8x1xf32> to vector<1x8x8xf32>
    %116 = arith.mulf %111, %115 : vector<1x8x8xf32>
    %117 = arith.truncf %116 : vector<1x8x8xf32> to vector<1x8x8xbf16>
    "tpu.trace_start"() <{level = 10 : i32, message = "bqk,bkd->bqd"}> : () -> ()
    %cst_34 = arith.constant dense<0.000000e+00> : vector<1x8x8xf32>
    %118 = tpu.matmul %117, %105, %cst_34 {dimension_numbers = #tpu.dot_dimension_numbers<[2], [1], [1], [2], [0, 0, 0, 1, 1, 2], [0], [0]>} : vector<1x8x8xbf16>, vector<1x8x8xbf16>, vector<1x8x8xf32> -> vector<1x8x8xf32>
    "tpu.trace_stop"() : () -> ()
    %119 = vector.shape_cast %118 : vector<1x8x8xf32> to vector<8x8xf32>
    %120 = arith.truncf %119 : vector<8x8xf32> to vector<8x8xbf16>
    %c0_35 = arith.constant 0 : index
    %c24 = arith.constant 24 : index
    %c0_36 = arith.constant 0 : index
    %121 = vector.load %arg5[%c0_35, %c24, %c0_36] : memref<1x32x32xbf16, #tpu.memory_space<vmem>>, vector<1x8x32xbf16>
    %122 = vector.shape_cast %121 : vector<1x8x32xbf16> to vector<8x32xbf16>
    %cst_37 = arith.constant dense<0.000000e+00> : vector<8x32xf32>
    %123 = tpu.matmul %120, %122, %cst_37 {dimension_numbers = #tpu.dot_dimension_numbers<[1], [0], [0], [1], [0, 0, 1, 1], [], []>} : vector<8x8xbf16>, vector<8x32xbf16>, vector<8x32xf32> -> vector<8x32xf32>
    %124 = arith.addf %96, %123 : vector<8x32xf32>
    %c0_38 = arith.constant 0 : index
    %c0_39 = arith.constant 0 : index
    %c0_40 = arith.constant 0 : index
    %125 = vector.load %arg6[%c0_38, %c0_39, %c0_40] : memref<1x1x32xf32, #tpu.memory_space<vmem>>, vector<1x1x32xf32>
    %126 = vector.shape_cast %125 : vector<1x1x32xf32> to vector<1x32xf32>
    %127 = vector.broadcast %126 : vector<1x32xf32> to vector<8x32xf32>
    %128 = arith.addf %124, %127 : vector<8x32xf32>
    %129 = arith.addf %3, %128 : vector<8x32xf32>
    %c0_41 = arith.constant 0 : index
    %c0_42 = arith.constant 0 : index
    %c0_43 = arith.constant 0 : index
    %130 = vector.load %arg7[%c0_41, %c0_42, %c0_43] : memref<1x1x32xf32, #tpu.memory_space<vmem>>, vector<1x1x32xf32>
    %131 = vector.shape_cast %130 : vector<1x1x32xf32> to vector<1x32xf32>
    %c0_44 = arith.constant 0 : index
    %c0_45 = arith.constant 0 : index
    %c0_46 = arith.constant 0 : index
    %132 = vector.load %arg8[%c0_44, %c0_45, %c0_46] : memref<1x1x32xf32, #tpu.memory_space<vmem>>, vector<1x1x32xf32>
    %133 = vector.shape_cast %132 : vector<1x1x32xf32> to vector<1x32xf32>
    %cst_47 = arith.constant dense<0.000000e+00> : vector<8xf32>
    %134 = vector.multi_reduction <add>, %129, %cst_47 [1] : vector<8x32xf32> to vector<8xf32>
    %135 = vector.shape_cast %134 : vector<8xf32> to vector<8x1xf32>
    %cst_48 = arith.constant 3.200000e+01 : f32
    %136 = vector.broadcast %cst_48 : f32 to vector<8x1xf32>
    %137 = arith.divf %135, %136 : vector<8x1xf32>
    %138 = vector.broadcast %137 : vector<8x1xf32> to vector<8x32xf32>
    %139 = arith.subf %129, %138 : vector<8x32xf32>
    %140 = arith.mulf %139, %139 : vector<8x32xf32>
    %cst_49 = arith.constant dense<0.000000e+00> : vector<8xf32>
    %141 = vector.multi_reduction <add>, %140, %cst_49 [1] : vector<8x32xf32> to vector<8xf32>
    %142 = vector.shape_cast %141 : vector<8xf32> to vector<8x1xf32>
    %cst_50 = arith.constant 3.200000e+01 : f32
    %143 = vector.broadcast %cst_50 : f32 to vector<8x1xf32>
    %144 = arith.divf %142, %143 : vector<8x1xf32>
    %145 = vector.broadcast %137 : vector<8x1xf32> to vector<8x32xf32>
    %146 = arith.subf %129, %145 : vector<8x32xf32>
    %cst_51 = arith.constant 9.99999974E-6 : f32
    %147 = vector.broadcast %cst_51 : f32 to vector<8x1xf32>
    %148 = arith.addf %144, %147 : vector<8x1xf32>
    %149 = math.rsqrt %148 : vector<8x1xf32>
    %150 = vector.broadcast %149 : vector<8x1xf32> to vector<8x32xf32>
    %151 = arith.mulf %146, %150 : vector<8x32xf32>
    %152 = vector.broadcast %131 : vector<1x32xf32> to vector<8x32xf32>
    %153 = arith.mulf %151, %152 : vector<8x32xf32>
    %154 = vector.broadcast %133 : vector<1x32xf32> to vector<8x32xf32>
    %155 = arith.addf %153, %154 : vector<8x32xf32>
    %156 = arith.truncf %155 : vector<8x32xf32> to vector<8x32xbf16>
    %c0_52 = arith.constant 0 : index
    %c0_53 = arith.constant 0 : index
    %c0_54 = arith.constant 0 : index
    %157 = vector.load %arg9[%c0_52, %c0_53, %c0_54] : memref<1x32x128xbf16, #tpu.memory_space<vmem>>, vector<1x32x128xbf16>
    %158 = vector.shape_cast %157 : vector<1x32x128xbf16> to vector<32x128xbf16>
    %cst_55 = arith.constant dense<0.000000e+00> : vector<8x128xf32>
    %159 = tpu.matmul %156, %158, %cst_55 {dimension_numbers = #tpu.dot_dimension_numbers<[1], [0], [0], [1], [0, 0, 1, 1], [], []>} : vector<8x32xbf16>, vector<32x128xbf16>, vector<8x128xf32> -> vector<8x128xf32>
    %c0_56 = arith.constant 0 : index
    %c0_57 = arith.constant 0 : index
    %c0_58 = arith.constant 0 : index
    %160 = vector.load %arg10[%c0_56, %c0_57, %c0_58] : memref<1x1x128xf32, #tpu.memory_space<vmem>>, vector<1x1x128xf32>
    %161 = vector.shape_cast %160 : vector<1x1x128xf32> to vector<1x128xf32>
    %162 = vector.broadcast %161 : vector<1x128xf32> to vector<8x128xf32>
    %163 = arith.addf %159, %162 : vector<8x128xf32>
    %cst_59 = arith.constant 0.000000e+00 : f32
    %164 = vector.broadcast %cst_59 : f32 to vector<8x128xf32>
    %165 = arith.maximumf %163, %164 : vector<8x128xf32>
    %166 = arith.truncf %165 : vector<8x128xf32> to vector<8x128xbf16>
    %c0_60 = arith.constant 0 : index
    %c0_61 = arith.constant 0 : index
    %c0_62 = arith.constant 0 : index
    %167 = vector.load %arg11[%c0_60, %c0_61, %c0_62] : memref<1x128x32xbf16, #tpu.memory_space<vmem>>, vector<1x128x32xbf16>
    %168 = vector.shape_cast %167 : vector<1x128x32xbf16> to vector<128x32xbf16>
    %cst_63 = arith.constant dense<0.000000e+00> : vector<8x32xf32>
    %169 = tpu.matmul %166, %168, %cst_63 {dimension_numbers = #tpu.dot_dimension_numbers<[1], [0], [0], [1], [0, 0, 1, 1], [], []>} : vector<8x128xbf16>, vector<128x32xbf16>, vector<8x32xf32> -> vector<8x32xf32>
    %c0_64 = arith.constant 0 : index
    %c0_65 = arith.constant 0 : index
    %c0_66 = arith.constant 0 : index
    %170 = vector.load %arg12[%c0_64, %c0_65, %c0_66] : memref<1x1x32xf32, #tpu.memory_space<vmem>>, vector<1x1x32xf32>
    %171 = vector.shape_cast %170 : vector<1x1x32xf32> to vector<1x32xf32>
    %172 = vector.broadcast %171 : vector<1x32xf32> to vector<8x32xf32>
    %173 = arith.addf %169, %172 : vector<8x32xf32>
    %174 = arith.addf %155, %173 : vector<8x32xf32>
    %c0_67 = arith.constant 0 : index
    %c0_68 = arith.constant 0 : index
    %c0_69 = arith.constant 0 : index
    %175 = vector.load %arg13[%c0_67, %c0_68, %c0_69] : memref<1x1x32xf32, #tpu.memory_space<vmem>>, vector<1x1x32xf32>
    %176 = vector.shape_cast %175 : vector<1x1x32xf32> to vector<1x32xf32>
    %c0_70 = arith.constant 0 : index
    %c0_71 = arith.constant 0 : index
    %c0_72 = arith.constant 0 : index
    %177 = vector.load %arg14[%c0_70, %c0_71, %c0_72] : memref<1x1x32xf32, #tpu.memory_space<vmem>>, vector<1x1x32xf32>
    %178 = vector.shape_cast %177 : vector<1x1x32xf32> to vector<1x32xf32>
    %cst_73 = arith.constant dense<0.000000e+00> : vector<8xf32>
    %179 = vector.multi_reduction <add>, %174, %cst_73 [1] : vector<8x32xf32> to vector<8xf32>
    %180 = vector.shape_cast %179 : vector<8xf32> to vector<8x1xf32>
    %cst_74 = arith.constant 3.200000e+01 : f32
    %181 = vector.broadcast %cst_74 : f32 to vector<8x1xf32>
    %182 = arith.divf %180, %181 : vector<8x1xf32>
    %183 = vector.broadcast %182 : vector<8x1xf32> to vector<8x32xf32>
    %184 = arith.subf %174, %183 : vector<8x32xf32>
    %185 = arith.mulf %184, %184 : vector<8x32xf32>
    %cst_75 = arith.constant dense<0.000000e+00> : vector<8xf32>
    %186 = vector.multi_reduction <add>, %185, %cst_75 [1] : vector<8x32xf32> to vector<8xf32>
    %187 = vector.shape_cast %186 : vector<8xf32> to vector<8x1xf32>
    %cst_76 = arith.constant 3.200000e+01 : f32
    %188 = vector.broadcast %cst_76 : f32 to vector<8x1xf32>
    %189 = arith.divf %187, %188 : vector<8x1xf32>
    %190 = vector.broadcast %182 : vector<8x1xf32> to vector<8x32xf32>
    %191 = arith.subf %174, %190 : vector<8x32xf32>
    %cst_77 = arith.constant 9.99999974E-6 : f32
    %192 = vector.broadcast %cst_77 : f32 to vector<8x1xf32>
    %193 = arith.addf %189, %192 : vector<8x1xf32>
    %194 = math.rsqrt %193 : vector<8x1xf32>
    %195 = vector.broadcast %194 : vector<8x1xf32> to vector<8x32xf32>
    %196 = arith.mulf %191, %195 : vector<8x32xf32>
    %197 = vector.broadcast %176 : vector<1x32xf32> to vector<8x32xf32>
    %198 = arith.mulf %196, %197 : vector<8x32xf32>
    %199 = vector.broadcast %178 : vector<1x32xf32> to vector<8x32xf32>
    %200 = arith.addf %198, %199 : vector<8x32xf32>
    %c0_78 = arith.constant 0 : index
    %c0_79 = arith.constant 0 : index
    %201 = vector.load %arg18[%c0_78, %c0_79] : memref<8x32xf32, #tpu.memory_space<vmem>>, vector<8x32xf32>
    tpu.vector_store %arg18[%c0_78, %c0_79], %200 {strides = array<i32>} : memref<8x32xf32, #tpu.memory_space<vmem>>, vector<8x32xf32>,
    %c1_i32 = arith.constant 1 : i32
    %202 = arith.cmpi eq, %arg1, %c1_i32 : i32
    %203 = arith.extui %202 : i1 to i32
    %c0_i32_80 = arith.constant 0 : i32
    %204 = arith.cmpi ne, %203, %c0_i32_80 : i32
    scf.if %204 {
      %205 = arith.truncf %200 : vector<8x32xf32> to vector<8x32xbf16>
      %c0_81 = arith.constant 0 : index
      %c0_82 = arith.constant 0 : index
      %206 = vector.load %arg15[%c0_81, %c0_82] : memref<32x32xbf16, #tpu.memory_space<vmem>>, vector<32x32xbf16>
      %cst_83 = arith.constant dense<0.000000e+00> : vector<8x32xf32>
      %207 = tpu.matmul %205, %206, %cst_83 {dimension_numbers = #tpu.dot_dimension_numbers<[1], [0], [0], [1], [0, 0, 1, 1], [], []>} : vector<8x32xbf16>, vector<32x32xbf16>, vector<8x32xf32> -> vector<8x32xf32>
      %c0_84 = arith.constant 0 : index
      %c0_85 = arith.constant 0 : index
      %208 = vector.load %arg16[%c0_84, %c0_85] : memref<1x32xf32, #tpu.memory_space<vmem>>, vector<1x32xf32>
      %209 = vector.broadcast %208 : vector<1x32xf32> to vector<8x32xf32>
      %210 = arith.addf %207, %209 : vector<8x32xf32>
      %211 = vector.shape_cast %210 : vector<8x32xf32> to vector<1x8x32xf32>
      %c0_86 = arith.constant 0 : index
      %c0_87 = arith.constant 0 : index
      %c0_88 = arith.constant 0 : index
      %212 = vector.load %arg17[%c0_86, %c0_87, %c0_88] : memref<1x8x32xf32, #tpu.memory_space<vmem>>, vector<1x8x32xf32>
      tpu.vector_store %arg17[%c0_86, %c0_87, %c0_88], %211 {strides = array<i32>} : memref<1x8x32xf32, #tpu.memory_space<vmem>>, vector<1x8x32xf32>,
    } else {
    }
    return
  }
  func.func @transform_0(%arg0: i32, %arg1: i32) -> (i32, i32, i32) {
    %c0_i32 = arith.constant 0 : i32
    %c0_i32_0 = arith.constant 0 : i32
    %c0_i32_1 = arith.constant 0 : i32
    return %arg0, %c0_i32, %c0_i32_0 : i32, i32, i32
  }
  func.func @transform_1(%arg0: i32, %arg1: i32) -> (i32, i32, i32) {
    %c0_i32 = arith.constant 0 : i32
    %c0_i32_0 = arith.constant 0 : i32
    %c0_i32_1 = arith.constant 0 : i32
    return %arg1, %c0_i32, %c0_i32_0 : i32, i32, i32
  }
  func.func @transform_2(%arg0: i32, %arg1: i32) -> (i32, i32, i32) {
    %c0_i32 = arith.constant 0 : i32
    %c0_i32_0 = arith.constant 0 : i32
    %c0_i32_1 = arith.constant 0 : i32
    return %arg1, %c0_i32, %c0_i32_0 : i32, i32, i32
  }
  func.func @transform_3(%arg0: i32, %arg1: i32) -> (i32, i32, i32) {
    %c0_i32 = arith.constant 0 : i32
    %c0_i32_0 = arith.constant 0 : i32
    %c0_i32_1 = arith.constant 0 : i32
    return %arg1, %c0_i32, %c0_i32_0 : i32, i32, i32
  }
  func.func @transform_4(%arg0: i32, %arg1: i32) -> (i32, i32, i32) {
    %c0_i32 = arith.constant 0 : i32
    %c0_i32_0 = arith.constant 0 : i32
    %c0_i32_1 = arith.constant 0 : i32
    return %arg1, %c0_i32, %c0_i32_0 : i32, i32, i32
  }
  func.func @transform_5(%arg0: i32, %arg1: i32) -> (i32, i32, i32) {
    %c0_i32 = arith.constant 0 : i32
    %c0_i32_0 = arith.constant 0 : i32
    %c0_i32_1 = arith.constant 0 : i32
    return %arg1, %c0_i32, %c0_i32_0 : i32, i32, i32
  }
  func.func @transform_6(%arg0: i32, %arg1: i32) -> (i32, i32, i32) {
    %c0_i32 = arith.constant 0 : i32
    %c0_i32_0 = arith.constant 0 : i32
    %c0_i32_1 = arith.constant 0 : i32
    return %arg1, %c0_i32, %c0_i32_0 : i32, i32, i32
  }
  func.func @transform_7(%arg0: i32, %arg1: i32) -> (i32, i32, i32) {
    %c0_i32 = arith.constant 0 : i32
    %c0_i32_0 = arith.constant 0 : i32
    %c0_i32_1 = arith.constant 0 : i32
    return %arg1, %c0_i32, %c0_i32_0 : i32, i32, i32
  }
  func.func @transform_8(%arg0: i32, %arg1: i32) -> (i32, i32, i32) {
    %c0_i32 = arith.constant 0 : i32
    %c0_i32_0 = arith.constant 0 : i32
    %c0_i32_1 = arith.constant 0 : i32
    return %arg1, %c0_i32, %c0_i32_0 : i32, i32, i32
  }
  func.func @transform_9(%arg0: i32, %arg1: i32) -> (i32, i32, i32) {
    %c0_i32 = arith.constant 0 : i32
    %c0_i32_0 = arith.constant 0 : i32
    %c0_i32_1 = arith.constant 0 : i32
    return %arg1, %c0_i32, %c0_i32_0 : i32, i32, i32
  }
  func.func @transform_10(%arg0: i32, %arg1: i32) -> (i32, i32, i32) {
    %c0_i32 = arith.constant 0 : i32
    %c0_i32_0 = arith.constant 0 : i32
    %c0_i32_1 = arith.constant 0 : i32
    return %arg1, %c0_i32, %c0_i32_0 : i32, i32, i32
  }
  func.func @transform_11(%arg0: i32, %arg1: i32) -> (i32, i32, i32) {
    %c0_i32 = arith.constant 0 : i32
    %c0_i32_0 = arith.constant 0 : i32
    %c0_i32_1 = arith.constant 0 : i32
    return %arg1, %c0_i32, %c0_i32_0 : i32, i32, i32
  }
  func.func @transform_12(%arg0: i32, %arg1: i32) -> (i32, i32, i32) {
    %c0_i32 = arith.constant 0 : i32
    %c0_i32_0 = arith.constant 0 : i32
    %c0_i32_1 = arith.constant 0 : i32
    return %arg1, %c0_i32, %c0_i32_0 : i32, i32, i32
  }
  func.func @transform_13(%arg0: i32, %arg1: i32) -> (i32, i32) {
    %c0_i32 = arith.constant 0 : i32
    %c0_i32_0 = arith.constant 0 : i32
    %c0_i32_1 = arith.constant 0 : i32
    return %c0_i32, %c0_i32_0 : i32, i32
  }
  func.func @transform_14(%arg0: i32, %arg1: i32) -> (i32, i32) {
    %c0_i32 = arith.constant 0 : i32
    %c0_i32_0 = arith.constant 0 : i32
    %c0_i32_1 = arith.constant 0 : i32
    return %c0_i32, %c0_i32_0 : i32, i32
  }
  func.func @transform_15(%arg0: i32, %arg1: i32) -> (i32, i32, i32) {
    %c0_i32 = arith.constant 0 : i32
    %c0_i32_0 = arith.constant 0 : i32
    %c0_i32_1 = arith.constant 0 : i32
    return %arg0, %c0_i32, %c0_i32_0 : i32, i32, i32
  }
}

</mosaic_0001>

<llo_original>
// kernel: tpu_custom_call.1
$region0: #{tpu_custom_call.1}
  #allocation0 [shape = 'u32[]', space=smem, size = 0x4, offset = 0x4, fixed_abs, tag = 'smem constant byte address 0x4 - core index']
  #allocation1 [shape = 'u32[144,128]{1,0:T(1,128)}', space=vmem, size = 0x12000, scoped, tag = 'internal scratch']
  #allocation2 [shape = 'f32[8,32]{1,0:T(8,128)}', space=vmem, size = 0x1000, scoped, tag = 'scratch operand']
  %s0 = inlined_call_operand.vmem [shape: f32[2,8,32], index: 0, kind: input, shape index: {}]
  %s1 = inlined_call_operand.vmem [shape: bf16[2,32,96], index: 1, kind: input, shape index: {}]
  %s2 = inlined_call_operand.vmem [shape: f32[2,1,96], index: 2, kind: input, shape index: {}]
  %s3 = inlined_call_operand.vmem [shape: bf16[2,32,32], index: 3, kind: input, shape index: {}]
  %s4 = inlined_call_operand.vmem [shape: f32[2,1,32], index: 4, kind: input, shape index: {}]
  %s5 = inlined_call_operand.vmem [shape: f32[2,1,32], index: 5, kind: input, shape index: {}]
  %s6 = inlined_call_operand.vmem [shape: f32[2,1,32], index: 6, kind: input, shape index: {}]
  %s7 = inlined_call_operand.vmem [shape: bf16[2,32,128], index: 7, kind: input, shape index: {}]
  %s8 = inlined_call_operand.vmem [shape: f32[2,1,128], index: 8, kind: input, shape index: {}]
  %s9 = inlined_call_operand.vmem [shape: bf16[2,128,32], index: 9, kind: input, shape index: {}]
  %s10 = inlined_call_operand.vmem [shape: f32[2,1,32], index: 10, kind: input, shape index: {}]
  %s11 = inlined_call_operand.vmem [shape: f32[2,1,32], index: 11, kind: input, shape index: {}]
  %s12 = inlined_call_operand.vmem [shape: f32[2,1,32], index: 12, kind: input, shape index: {}]
  %s13 = inlined_call_operand.vmem [shape: bf16[32,32], index: 13, kind: input, shape index: {}]
  %s14 = inlined_call_operand.vmem [shape: f32[1,32], index: 14, kind: input, shape index: {}]
  %s15 = inlined_call_operand.hbm [shape: f32[2,8,32], index: 15, kind: output, shape index: {}]
  %s16 = sld [smem:[#allocation0]]
  $region101: #{tpu_custom_call.1} parent=0
    _
  %s18 = ssub.s32 1, %s16
  %s19 = scalar_select 0, %s18, %s16
  $region1: #{tpu_custom_call.1} parent=0
    #allocation3 [shape = 'u8[8192]{0}', space=vmem, size = 0x2000, scoped, tag = 'output window, operand 0']
    #allocation4 [shape = 's32[2]{0}', space=sflag, size = 0x8, scoped, tag = 'scoped memory for tpu_custom_call.1']
    %20 = vsyncpa [#allocation4], 0
    %s21 = scalar_lea.sflag [#allocation4], 1
    %22 = vsyncpa %s21, 0
    loop: start=0, step=1, limit=6
    $region2: #{tpu_custom_call.1} parent=1 // loop_pre_header
      _
    $region3: #{tpu_custom_call.1} parent=1 // loop_header
      %s24 = sphi 0, %s28
      %p25 = scmp.ge.s32.totalorder %s24, 6
      %s31 = sphi 0, %s43
      %s32 = sphi 0, %s39
      %s33 = sphi 0, %s31
      %s34 = sphi 0, %s32
      %s35 = sphi 0, %s33
      %s36 = sphi 0, %s34
      %s46 = sphi 0, %s48
      %s49 = sphi 0, %s46
      %s50 = sphi 0, %s49
      %s66 = sphi 0, %s50
      %s72 = sphi 0, %s74
      %s75 = sphi 0, %s72
      %s76 = sphi 0, %s75
      %s92 = sphi 0, %s76
      %s98 = sphi 0, %s100
      %s101 = sphi 0, %s98
      %s102 = sphi 0, %s101
      %s118 = sphi 0, %s102
      %s124 = sphi 0, %s126
      %s127 = sphi 0, %s124
      %s128 = sphi 0, %s127
      %s144 = sphi 0, %s128
      %s150 = sphi 0, %s152
      %s153 = sphi 0, %s150
      %s154 = sphi 0, %s153
      %s170 = sphi 0, %s154
      %s176 = sphi 0, %s178
      %s179 = sphi 0, %s176
      %s180 = sphi 0, %s179
      %s196 = sphi 0, %s180
      %s202 = sphi 0, %s204
      %s205 = sphi 0, %s202
      %s206 = sphi 0, %s205
      %s222 = sphi 0, %s206
      %s228 = sphi 0, %s230
      %s231 = sphi 0, %s228
      %s232 = sphi 0, %s231
      %s248 = sphi 0, %s232
      %s254 = sphi 0, %s256
      %s257 = sphi 0, %s254
      %s258 = sphi 0, %s257
      %s274 = sphi 0, %s258
      %s280 = sphi 0, %s282
      %s283 = sphi 0, %s280
      %s284 = sphi 0, %s283
      %s300 = sphi 0, %s284
      %s306 = sphi 0, %s308
      %s309 = sphi 0, %s306
      %s310 = sphi 0, %s309
      %s326 = sphi 0, %s310
      %s332 = sphi 0, %s334
      %s335 = sphi 0, %s332
      %s336 = sphi 0, %s335
      %s352 = sphi 0, %s336
      %s358 = sphi 0, %s360
      %s361 = sphi 0, %s358
      %s362 = sphi 0, %s361
      %s378 = sphi 0, %s362
      %s382 = sphi 0, %s382
      %s384 = sphi 0, %s382
      %s385 = sphi 0, %s384
      %s399 = sphi 0, %s385
      %s403 = sphi 0, %s403
      %s405 = sphi 0, %s403
      %s406 = sphi 0, %s405
      %s420 = sphi 0, %s406
      %s426 = sphi 0, %s428
      %s429 = sphi 0, %s426
      %s430 = sphi 0, %s429
      %s446 = sphi 0, %s430
    $region4: #{tpu_custom_call.1} parent=1 // loop_header_branch
      %27 = sbr.rel (%p25) target = $region8
    $region5: #{tpu_custom_call.1} parent=1 // loop_body
      %s29 = ssub.s32 %s24, 1
      %s30 = ssub.s32 %s24, 2
      %s37 = sadd.s32 1, %s32
      %p38 = scmp.ge.s32.totalorder %s37, 2
      %s39 = scalar_select %p38, 0, %s37
      %s40 = sadd.s32 1, %s31
      %s41 = scalar_select %p38, %s40, %s31
      %p42 = scmp.ge.s32.totalorder %s41, 2
      %s43 = scalar_select %p42, 0, %s41
      %s44 = ssub.s32 %s31, %s43
      %p45 = scmp.eq.s32.totalorder %s44, 0
      %s47 = sadd.s32 %s46, 1
      %s48 = scalar_select %p45, %s46, %s47
      %p51 = pneg %p45
      %p52 = scmp.eq.s32.totalorder %s24, 3
      %p53 = por %p51, %p52
      %p54 = scmp.ne.s32.totalorder %s46, %s49
      %p55 = scmp.eq.s32.totalorder %s24, 0
      %p56 = por %p54, %p55
      %p57 = scmp.ne.s32.totalorder %s46, %s49
      %p58 = scmp.eq.s32.totalorder %s29, 3
      %p59 = por %p57, %p58
      %p60 = scmp.ne.s32.totalorder %s49, %s50
      %p61 = scmp.eq.s32.totalorder %s29, 0
      %p62 = por %p60, %p61
      %p63 = scmp.ne.s32.totalorder %s49, %s50
      %p64 = scmp.eq.s32.totalorder %s30, 3
      %p65 = por %p63, %p64
      %p67 = scmp.ne.s32.totalorder %s50, %s66
      %p68 = scmp.eq.s32.totalorder %s30, 0
      %p69 = por %p67, %p68
      %s70 = ssub.s32 %s32, %s39
      %p71 = scmp.eq.s32.totalorder %s70, 0
      %s73 = sadd.s32 %s72, 1
      %s74 = scalar_select %p71, %s72, %s73
      %p77 = pneg %p71
      %p78 = scmp.eq.s32.totalorder %s24, 3
      %p79 = por %p77, %p78
      %p80 = scmp.ne.s32.totalorder %s72, %s75
      %p81 = scmp.eq.s32.totalorder %s24, 0
      %p82 = por %p80, %p81
      %p83 = scmp.ne.s32.totalorder %s72, %s75
      %p84 = scmp.eq.s32.totalorder %s29, 3
      %p85 = por %p83, %p84
      %p86 = scmp.ne.s32.totalorder %s75, %s76
      %p87 = scmp.eq.s32.totalorder %s29, 0
      %p88 = por %p86, %p87
      %p89 = scmp.ne.s32.totalorder %s75, %s76
      %p90 = scmp.eq.s32.totalorder %s30, 3
      %p91 = por %p89, %p90
      %p93 = scmp.ne.s32.totalorder %s76, %s92
      %p94 = scmp.eq.s32.totalorder %s30, 0
      %p95 = por %p93, %p94
      %s96 = ssub.s32 %s32, %s39
      %p97 = scmp.eq.s32.totalorder %s96, 0
      %s99 = sadd.s32 %s98, 1
      %s100 = scalar_select %p97, %s98, %s99
      %p103 = pneg %p97
      %p104 = scmp.eq.s32.totalorder %s24, 3
      %p105 = por %p103, %p104
      %p106 = scmp.ne.s32.totalorder %s98, %s101
      %p107 = scmp.eq.s32.totalorder %s24, 0
      %p108 = por %p106, %p107
      %p109 = scmp.ne.s32.totalorder %s98, %s101
      %p110 = scmp.eq.s32.totalorder %s29, 3
      %p111 = por %p109, %p110
      %p112 = scmp.ne.s32.totalorder %s101, %s102
      %p113 = scmp.eq.s32.totalorder %s29, 0
      %p114 = por %p112, %p113
      %p115 = scmp.ne.s32.totalorder %s101, %s102
      %p116 = scmp.eq.s32.totalorder %s30, 3
      %p117 = por %p115, %p116
      %p119 = scmp.ne.s32.totalorder %s102, %s118
      %p120 = scmp.eq.s32.totalorder %s30, 0
      %p121 = por %p119, %p120
      %s122 = ssub.s32 %s32, %s39
      %p123 = scmp.eq.s32.totalorder %s122, 0
      %s125 = sadd.s32 %s124, 1
      %s126 = scalar_select %p123, %s124, %s125
      %p129 = pneg %p123
      %p130 = scmp.eq.s32.totalorder %s24, 3
      %p131 = por %p129, %p130
      %p132 = scmp.ne.s32.totalorder %s124, %s127
      %p133 = scmp.eq.s32.totalorder %s24, 0
      %p134 = por %p132, %p133
      %p135 = scmp.ne.s32.totalorder %s124, %s127
      %p136 = scmp.eq.s32.totalorder %s29, 3
      %p137 = por %p135, %p136
      %p138 = scmp.ne.s32.totalorder %s127, %s128
      %p139 = scmp.eq.s32.totalorder %s29, 0
      %p140 = por %p138, %p139
      %p141 = scmp.ne.s32.totalorder %s127, %s128
      %p142 = scmp.eq.s32.totalorder %s30, 3
      %p143 = por %p141, %p142
      %p145 = scmp.ne.s32.totalorder %s128, %s144
      %p146 = scmp.eq.s32.totalorder %s30, 0
      %p147 = por %p145, %p146
      %s148 = ssub.s32 %s32, %s39
      %p149 = scmp.eq.s32.totalorder %s148, 0
      %s151 = sadd.s32 %s150, 1
      %s152 = scalar_select %p149, %s150, %s151
      %p155 = pneg %p149
      %p156 = scmp.eq.s32.totalorder %s24, 3
      %p157 = por %p155, %p156
      %p158 = scmp.ne.s32.totalorder %s150, %s153
      %p159 = scmp.eq.s32.totalorder %s24, 0
      %p160 = por %p158, %p159
      %p161 = scmp.ne.s32.totalorder %s150, %s153
      %p162 = scmp.eq.s32.totalorder %s29, 3
      %p163 = por %p161, %p162
      %p164 = scmp.ne.s32.totalorder %s153, %s154
      %p165 = scmp.eq.s32.totalorder %s29, 0
      %p166 = por %p164, %p165
      %p167 = scmp.ne.s32.totalorder %s153, %s154
      %p168 = scmp.eq.s32.totalorder %s30, 3
      %p169 = por %p167, %p168
      %p171 = scmp.ne.s32.totalorder %s154, %s170
      %p172 = scmp.eq.s32.totalorder %s30, 0
      %p173 = por %p171, %p172
      %s174 = ssub.s32 %s32, %s39
      %p175 = scmp.eq.s32.totalorder %s174, 0
      %s177 = sadd.s32 %s176, 1
      %s178 = scalar_select %p175, %s176, %s177
      %p181 = pneg %p175
      %p182 = scmp.eq.s32.totalorder %s24, 3
      %p183 = por %p181, %p182
      %p184 = scmp.ne.s32.totalorder %s176, %s179
      %p185 = scmp.eq.s32.totalorder %s24, 0
      %p186 = por %p184, %p185
      %p187 = scmp.ne.s32.totalorder %s176, %s179
      %p188 = scmp.eq.s32.totalorder %s29, 3
      %p189 = por %p187, %p188
      %p190 = scmp.ne.s32.totalorder %s179, %s180
      %p191 = scmp.eq.s32.totalorder %s29, 0
      %p192 = por %p190, %p191
      %p193 = scmp.ne.s32.totalorder %s179, %s180
      %p194 = scmp.eq.s32.totalorder %s30, 3
      %p195 = por %p193, %p194
      %p197 = scmp.ne.s32.totalorder %s180, %s196
      %p198 = scmp.eq.s32.totalorder %s30, 0
      %p199 = por %p197, %p198
      %s200 = ssub.s32 %s32, %s39
      %p201 = scmp.eq.s32.totalorder %s200, 0
      %s203 = sadd.s32 %s202, 1
      %s204 = scalar_select %p201, %s202, %s203
      %p207 = pneg %p201
      %p208 = scmp.eq.s32.totalorder %s24, 3
      %p209 = por %p207, %p208
      %p210 = scmp.ne.s32.totalorder %s202, %s205
      %p211 = scmp.eq.s32.totalorder %s24, 0
      %p212 = por %p210, %p211
      %p213 = scmp.ne.s32.totalorder %s202, %s205
      %p214 = scmp.eq.s32.totalorder %s29, 3
      %p215 = por %p213, %p214
      %p216 = scmp.ne.s32.totalorder %s205, %s206
      %p217 = scmp.eq.s32.totalorder %s29, 0
      %p218 = por %p216, %p217
      %p219 = scmp.ne.s32.totalorder %s205, %s206
      %p220 = scmp.eq.s32.totalorder %s30, 3
      %p221 = por %p219, %p220
      %p223 = scmp.ne.s32.totalorder %s206, %s222
      %p224 = scmp.eq.s32.totalorder %s30, 0
      %p225 = por %p223, %p224
      %s226 = ssub.s32 %s32, %s39
      %p227 = scmp.eq.s32.totalorder %s226, 0
      %s229 = sadd.s32 %s228, 1
      %s230 = scalar_select %p227, %s228, %s229
      %p233 = pneg %p227
      %p234 = scmp.eq.s32.totalorder %s24, 3
      %p235 = por %p233, %p234
      %p236 = scmp.ne.s32.totalorder %s228, %s231
      %p237 = scmp.eq.s32.totalorder %s24, 0
      %p238 = por %p236, %p237
      %p239 = scmp.ne.s32.totalorder %s228, %s231
      %p240 = scmp.eq.s32.totalorder %s29, 3
      %p241 = por %p239, %p240
      %p242 = scmp.ne.s32.totalorder %s231, %s232
      %p243 = scmp.eq.s32.totalorder %s29, 0
      %p244 = por %p242, %p243
      %p245 = scmp.ne.s32.totalorder %s231, %s232
      %p246 = scmp.eq.s32.totalorder %s30, 3
      %p247 = por %p245, %p246
      %p249 = scmp.ne.s32.totalorder %s232, %s248
      %p250 = scmp.eq.s32.totalorder %s30, 0
      %p251 = por %p249, %p250
      %s252 = ssub.s32 %s32, %s39
      %p253 = scmp.eq.s32.totalorder %s252, 0
      %s255 = sadd.s32 %s254, 1
      %s256 = scalar_select %p253, %s254, %s255
      %p259 = pneg %p253
      %p260 = scmp.eq.s32.totalorder %s24, 3
      %p261 = por %p259, %p260
      %p262 = scmp.ne.s32.totalorder %s254, %s257
      %p263 = scmp.eq.s32.totalorder %s24, 0
      %p264 = por %p262, %p263
      %p265 = scmp.ne.s32.totalorder %s254, %s257
      %p266 = scmp.eq.s32.totalorder %s29, 3
      %p267 = por %p265, %p266
      %p268 = scmp.ne.s32.totalorder %s257, %s258
      %p269 = scmp.eq.s32.totalorder %s29, 0
      %p270 = por %p268, %p269
      %p271 = scmp.ne.s32.totalorder %s257, %s258
      %p272 = scmp.eq.s32.totalorder %s30, 3
      %p273 = por %p271, %p272
      %p275 = scmp.ne.s32.totalorder %s258, %s274
      %p276 = scmp.eq.s32.totalorder %s30, 0
      %p277 = por %p275, %p276
      %s278 = ssub.s32 %s32, %s39
      %p279 = scmp.eq.s32.totalorder %s278, 0
      %s281 = sadd.s32 %s280, 1
      %s282 = scalar_select %p279, %s280, %s281
      %p285 = pneg %p279
      %p286 = scmp.eq.s32.totalorder %s24, 3
      %p287 = por %p285, %p286
      %p288 = scmp.ne.s32.totalorder %s280, %s283
      %p289 = scmp.eq.s32.totalorder %s24, 0
      %p290 = por %p288, %p289
      %p291 = scmp.ne.s32.totalorder %s280, %s283
      %p292 = scmp.eq.s32.totalorder %s29, 3
      %p293 = por %p291, %p292
      %p294 = scmp.ne.s32.totalorder %s283, %s284
      %p295 = scmp.eq.s32.totalorder %s29, 0
      %p296 = por %p294, %p295
      %p297 = scmp.ne.s32.totalorder %s283, %s284
      %p298 = scmp.eq.s32.totalorder %s30, 3
      %p299 = por %p297, %p298
      %p301 = scmp.ne.s32.totalorder %s284, %s300
      %p302 = scmp.eq.s32.totalorder %s30, 0
      %p303 = por %p301, %p302
      %s304 = ssub.s32 %s32, %s39
      %p305 = scmp.eq.s32.totalorder %s304, 0
      %s307 = sadd.s32 %s306, 1
      %s308 = scalar_select %p305, %s306, %s307
      %p311 = pneg %p305
      %p312 = scmp.eq.s32.totalorder %s24, 3
      %p313 = por %p311, %p312
      %p314 = scmp.ne.s32.totalorder %s306, %s309
      %p315 = scmp.eq.s32.totalorder %s24, 0
      %p316 = por %p314, %p315
      %p317 = scmp.ne.s32.totalorder %s306, %s309
      %p318 = scmp.eq.s32.totalorder %s29, 3
      %p319 = por %p317, %p318
      %p320 = scmp.ne.s32.totalorder %s309, %s310
      %p321 = scmp.eq.s32.totalorder %s29, 0
      %p322 = por %p320, %p321
      %p323 = scmp.ne.s32.totalorder %s309, %s310
      %p324 = scmp.eq.s32.totalorder %s30, 3
      %p325 = por %p323, %p324
      %p327 = scmp.ne.s32.totalorder %s310, %s326
      %p328 = scmp.eq.s32.totalorder %s30, 0
      %p329 = por %p327, %p328
      %s330 = ssub.s32 %s32, %s39
      %p331 = scmp.eq.s32.totalorder %s330, 0
      %s333 = sadd.s32 %s332, 1
      %s334 = scalar_select %p331, %s332, %s333
      %p337 = pneg %p331
      %p338 = scmp.eq.s32.totalorder %s24, 3
      %p339 = por %p337, %p338
      %p340 = scmp.ne.s32.totalorder %s332, %s335
      %p341 = scmp.eq.s32.totalorder %s24, 0
      %p342 = por %p340, %p341
      %p343 = scmp.ne.s32.totalorder %s332, %s335
      %p344 = scmp.eq.s32.totalorder %s29, 3
      %p345 = por %p343, %p344
      %p346 = scmp.ne.s32.totalorder %s335, %s336
      %p347 = scmp.eq.s32.totalorder %s29, 0
      %p348 = por %p346, %p347
      %p349 = scmp.ne.s32.totalorder %s335, %s336
      %p350 = scmp.eq.s32.totalorder %s30, 3
      %p351 = por %p349, %p350
      %p353 = scmp.ne.s32.totalorder %s336, %s352
      %p354 = scmp.eq.s32.totalorder %s30, 0
      %p355 = por %p353, %p354
      %s356 = ssub.s32 %s32, %s39
      %p357 = scmp.eq.s32.totalorder %s356, 0
      %s359 = sadd.s32 %s358, 1
      %s360 = scalar_select %p357, %s358, %s359
      %p363 = pneg %p357
      %p364 = scmp.eq.s32.totalorder %s24, 3
      %p365 = por %p363, %p364
      %p366 = scmp.ne.s32.totalorder %s358, %s361
      %p367 = scmp.eq.s32.totalorder %s24, 0
      %p368 = por %p366, %p367
      %p369 = scmp.ne.s32.totalorder %s358, %s361
      %p370 = scmp.eq.s32.totalorder %s29, 3
      %p371 = por %p369, %p370
      %p372 = scmp.ne.s32.totalorder %s361, %s362
      %p373 = scmp.eq.s32.totalorder %s29, 0
      %p374 = por %p372, %p373
      %p375 = scmp.ne.s32.totalorder %s361, %s362
      %p376 = scmp.eq.s32.totalorder %s30, 3
      %p377 = por %p375, %p376
      %p379 = scmp.ne.s32.totalorder %s362, %s378
      %p380 = scmp.eq.s32.totalorder %s30, 0
      %p381 = por %p379, %p380
      %s383 = sadd.s32 %s382, 1
      %p386 = scmp.eq.s32.totalorder %s24, 3
      %p387 = scmp.ne.s32.totalorder %s382, %s384
      %p388 = scmp.eq.s32.totalorder %s24, 0
      %p389 = por %p387, %p388
      %p390 = scmp.ne.s32.totalorder %s382, %s384
      %p391 = scmp.eq.s32.totalorder %s29, 3
      %p392 = por %p390, %p391
      %p393 = scmp.ne.s32.totalorder %s384, %s385
      %p394 = scmp.eq.s32.totalorder %s29, 0
      %p395 = por %p393, %p394
      %p396 = scmp.ne.s32.totalorder %s384, %s385
      %p397 = scmp.eq.s32.totalorder %s30, 3
      %p398 = por %p396, %p397
      %p400 = scmp.ne.s32.totalorder %s385, %s399
      %p401 = scmp.eq.s32.totalorder %s30, 0
      %p402 = por %p400, %p401
      %s404 = sadd.s32 %s403, 1
      %p407 = scmp.eq.s32.totalorder %s24, 3
      %p408 = scmp.ne.s32.totalorder %s403, %s405
      %p409 = scmp.eq.s32.totalorder %s24, 0
      %p410 = por %p408, %p409
      %p411 = scmp.ne.s32.totalorder %s403, %s405
      %p412 = scmp.eq.s32.totalorder %s29, 3
      %p413 = por %p411, %p412
      %p414 = scmp.ne.s32.totalorder %s405, %s406
      %p415 = scmp.eq.s32.totalorder %s29, 0
      %p416 = por %p414, %p415
      %p417 = scmp.ne.s32.totalorder %s405, %s406
      %p418 = scmp.eq.s32.totalorder %s30, 3
      %p419 = por %p417, %p418
      %p421 = scmp.ne.s32.totalorder %s406, %s420
      %p422 = scmp.eq.s32.totalorder %s30, 0
      %p423 = por %p421, %p422
      %s424 = ssub.s32 %s31, %s43
      %p425 = scmp.eq.s32.totalorder %s424, 0
      %s427 = sadd.s32 %s426, 1
      %s428 = scalar_select %p425, %s426, %s427
      %p431 = pneg %p425
      %p432 = scmp.eq.s32.totalorder %s24, 3
      %p433 = por %p431, %p432
      %p434 = scmp.ne.s32.totalorder %s426, %s429
      %p435 = scmp.eq.s32.totalorder %s24, 0
      %p436 = por %p434, %p435
      %p437 = scmp.ne.s32.totalorder %s426, %s429
      %p438 = scmp.eq.s32.totalorder %s29, 3
      %p439 = por %p437, %p438
      %p440 = scmp.ne.s32.totalorder %s429, %s430
      %p441 = scmp.eq.s32.totalorder %s29, 0
      %p442 = por %p440, %p441
      %p443 = scmp.ne.s32.totalorder %s429, %s430
      %p444 = scmp.eq.s32.totalorder %s30, 3
      %p445 = por %p443, %p444
      %p447 = scmp.ne.s32.totalorder %s430, %s446
      %p448 = scmp.eq.s32.totalorder %s30, 0
      %p449 = por %p447, %p448
      %p450 = scmp.le.s32.totalorder 1, %s24
      %p451 = scmp.lt.s32.totalorder %s24, 5
      %p452 = pnand %p450, %p451
      %p453 = pneg %p452
      // Predicated region
      $region9: #{tpu_custom_call.1} parent=5 // pred_check
        _
      $region10: #{tpu_custom_call.1} parent=5 // pred_check_branch
        %455 = sbr.rel (%p452) target = $region12
      $region11: #{tpu_custom_call.1} parent=5 // pred_region
        %s456 = ssub.s32 %s24, 1
        // Predicated region
        $region13: #{tpu_custom_call.1} parent=11 // pred_check
          %p457 = pneg %p395
        $region14: #{tpu_custom_call.1} parent=11 // pred_check_branch
          %459 = sbr.rel (%p457) target = $region16
        $region15: #{tpu_custom_call.1} parent=11 // pred_region
          _
        $region16: #{tpu_custom_call.1} parent=11 // pred_fallthru
          _
        // Predicated region
        $region17: #{tpu_custom_call.1} parent=11 // pred_check
          %p460 = pneg %p416
        $region18: #{tpu_custom_call.1} parent=11 // pred_check_branch
          %462 = sbr.rel (%p460) target = $region20
        $region19: #{tpu_custom_call.1} parent=11 // pred_region
          _
        $region20: #{tpu_custom_call.1} parent=11 // pred_fallthru
          _
      $region12: #{tpu_custom_call.1} parent=5 // pred_fallthru
        _
      %p463 = scmp.lt.s32.totalorder %s24, 4
      // Predicated region
      $region21: #{tpu_custom_call.1} parent=5 // pred_check
        %p464 = pneg %p463
      $region22: #{tpu_custom_call.1} parent=5 // pred_check_branch
        %466 = sbr.rel (%p464) target = $region24
      $region23: #{tpu_custom_call.1} parent=5 // pred_region
        // Predicated region
        $region25: #{tpu_custom_call.1} parent=23 // pred_check
          %p467 = pneg %p56
        $region26: #{tpu_custom_call.1} parent=23 // pred_check_branch
          %469 = sbr.rel (%p467) target = $region28
        $region27: #{tpu_custom_call.1} parent=23 // pred_region
          %p470 = scmp.lt.s32.totalorder %s31, 1
          %s471 = scalar_select %p470, %s31, 1
          %s472 = smul.addr %s471, 8
          %s473 = scalar_lea.vmem %s0, %s472
        $region28: #{tpu_custom_call.1} parent=23 // pred_fallthru
          _
        // Predicated region
        $region29: #{tpu_custom_call.1} parent=23 // pred_check
          %p474 = pneg %p82
        $region30: #{tpu_custom_call.1} parent=23 // pred_check_branch
          %476 = sbr.rel (%p474) target = $region32
        $region31: #{tpu_custom_call.1} parent=23 // pred_region
          %p477 = scmp.lt.s32.totalorder %s32, 1
          %s478 = scalar_select %p477, %s32, 1
          %s479 = smul.addr %s478, 4
          %s480 = smul.addr %s479, 4
          %s481 = scalar_lea.vmem %s1, %s480
        $region32: #{tpu_custom_call.1} parent=23 // pred_fallthru
          _
        // Predicated region
        $region33: #{tpu_custom_call.1} parent=23 // pred_check
          %p482 = pneg %p108
        $region34: #{tpu_custom_call.1} parent=23 // pred_check_branch
          %484 = sbr.rel (%p482) target = $region36
        $region35: #{tpu_custom_call.1} parent=23 // pred_region
          %p485 = scmp.lt.s32.totalorder %s32, 1
          %s486 = scalar_select %p485, %s32, 1
          %s487 = scalar_lea.vmem %s2, %s486
        $region36: #{tpu_custom_call.1} parent=23 // pred_fallthru
          _
        // Predicated region
        $region37: #{tpu_custom_call.1} parent=23 // pred_check
          %p488 = pneg %p134
        $region38: #{tpu_custom_call.1} parent=23 // pred_check_branch
          %490 = sbr.rel (%p488) target = $region40
        $region39: #{tpu_custom_call.1} parent=23 // pred_region
          %p491 = scmp.lt.s32.totalorder %s32, 1
          %s492 = scalar_select %p491, %s32, 1
          %s493 = smul.addr %s492, 4
          %s494 = smul.addr %s493, 4
          %s495 = scalar_lea.vmem %s3, %s494
        $region40: #{tpu_custom_call.1} parent=23 // pred_fallthru
          _
        // Predicated region
        $region41: #{tpu_custom_call.1} parent=23 // pred_check
          %p496 = pneg %p160
        $region42: #{tpu_custom_call.1} parent=23 // pred_check_branch
          %498 = sbr.rel (%p496) target = $region44
        $region43: #{tpu_custom_call.1} parent=23 // pred_region
          %p499 = scmp.lt.s32.totalorder %s32, 1
          %s500 = scalar_select %p499, %s32, 1
          %s501 = scalar_lea.vmem %s4, %s500
        $region44: #{tpu_custom_call.1} parent=23 // pred_fallthru
          _
        // Predicated region
        $region45: #{tpu_custom_call.1} parent=23 // pred_check
          %p502 = pneg %p186
        $region46: #{tpu_custom_call.1} parent=23 // pred_check_branch
          %504 = sbr.rel (%p502) target = $region48
        $region47: #{tpu_custom_call.1} parent=23 // pred_region
          %p505 = scmp.lt.s32.totalorder %s32, 1
          %s506 = scalar_select %p505, %s32, 1
          %s507 = scalar_lea.vmem %s5, %s506
        $region48: #{tpu_custom_call.1} parent=23 // pred_fallthru
          _
        // Predicated region
        $region49: #{tpu_custom_call.1} parent=23 // pred_check
          %p508 = pneg %p212
        $region50: #{tpu_custom_call.1} parent=23 // pred_check_branch
          %510 = sbr.rel (%p508) target = $region52
        $region51: #{tpu_custom_call.1} parent=23 // pred_region
          %p511 = scmp.lt.s32.totalorder %s32, 1
          %s512 = scalar_select %p511, %s32, 1
          %s513 = scalar_lea.vmem %s6, %s512
        $region52: #{tpu_custom_call.1} parent=23 // pred_fallthru
          _
        // Predicated region
        $region53: #{tpu_custom_call.1} parent=23 // pred_check
          %p514 = pneg %p238
        $region54: #{tpu_custom_call.1} parent=23 // pred_check_branch
          %516 = sbr.rel (%p514) target = $region56
        $region55: #{tpu_custom_call.1} parent=23 // pred_region
          %p517 = scmp.lt.s32.totalorder %s32, 1
          %s518 = scalar_select %p517, %s32, 1
          %s519 = smul.addr %s518, 4
          %s520 = smul.addr %s519, 4
          %s521 = scalar_lea.vmem %s7, %s520
        $region56: #{tpu_custom_call.1} parent=23 // pred_fallthru
          _
        // Predicated region
        $region57: #{tpu_custom_call.1} parent=23 // pred_check
          %p522 = pneg %p264
        $region58: #{tpu_custom_call.1} parent=23 // pred_check_branch
          %524 = sbr.rel (%p522) target = $region60
        $region59: #{tpu_custom_call.1} parent=23 // pred_region
          %p525 = scmp.lt.s32.totalorder %s32, 1
          %s526 = scalar_select %p525, %s32, 1
          %s527 = scalar_lea.vmem %s8, %s526
        $region60: #{tpu_custom_call.1} parent=23 // pred_fallthru
          _
        // Predicated region
        $region61: #{tpu_custom_call.1} parent=23 // pred_check
          %p528 = pneg %p290
        $region62: #{tpu_custom_call.1} parent=23 // pred_check_branch
          %530 = sbr.rel (%p528) target = $region64
        $region63: #{tpu_custom_call.1} parent=23 // pred_region
          %p531 = scmp.lt.s32.totalorder %s32, 1
          %s532 = scalar_select %p531, %s32, 1
          %s533 = smul.addr %s532, 16
          %s534 = smul.addr %s533, 4
          %s535 = scalar_lea.vmem %s9, %s534
        $region64: #{tpu_custom_call.1} parent=23 // pred_fallthru
          _
        // Predicated region
        $region65: #{tpu_custom_call.1} parent=23 // pred_check
          %p536 = pneg %p316
        $region66: #{tpu_custom_call.1} parent=23 // pred_check_branch
          %538 = sbr.rel (%p536) target = $region68
        $region67: #{tpu_custom_call.1} parent=23 // pred_region
          %p539 = scmp.lt.s32.totalorder %s32, 1
          %s540 = scalar_select %p539, %s32, 1
          %s541 = scalar_lea.vmem %s10, %s540
        $region68: #{tpu_custom_call.1} parent=23 // pred_fallthru
          _
        // Predicated region
        $region69: #{tpu_custom_call.1} parent=23 // pred_check
          %p542 = pneg %p342
        $region70: #{tpu_custom_call.1} parent=23 // pred_check_branch
          %544 = sbr.rel (%p542) target = $region72
        $region71: #{tpu_custom_call.1} parent=23 // pred_region
          %p545 = scmp.lt.s32.totalorder %s32, 1
          %s546 = scalar_select %p545, %s32, 1
          %s547 = scalar_lea.vmem %s11, %s546
        $region72: #{tpu_custom_call.1} parent=23 // pred_fallthru
          _
        // Predicated region
        $region73: #{tpu_custom_call.1} parent=23 // pred_check
          %p548 = pneg %p368
        $region74: #{tpu_custom_call.1} parent=23 // pred_check_branch
          %550 = sbr.rel (%p548) target = $region76
        $region75: #{tpu_custom_call.1} parent=23 // pred_region
          %p551 = scmp.lt.s32.totalorder %s32, 1
          %s552 = scalar_select %p551, %s32, 1
          %s553 = scalar_lea.vmem %s12, %s552
        $region76: #{tpu_custom_call.1} parent=23 // pred_fallthru
          _
      $region24: #{tpu_custom_call.1} parent=5 // pred_fallthru
        _
      %p554 = scmp.le.s32.totalorder 1, %s24
      %p555 = scmp.lt.s32.totalorder %s24, 5
      %p556 = pnand %p554, %p555
      %p557 = pneg %p556
      // Predicated region
      $region77: #{tpu_custom_call.1} parent=5 // pred_check
        _
      $region78: #{tpu_custom_call.1} parent=5 // pred_check_branch
        %559 = sbr.rel (%p556) target = $region80
      $region79: #{tpu_custom_call.1} parent=5 // pred_region
        %s560 = ssub.s32 %s24, 1
        %p561 = scmp.lt.s32.totalorder %s33, 1
        %s562 = scalar_select %p561, %s33, 1
        %s563 = smul.addr %s562, 8
        %s564 = scalar_lea.vmem %s0, %s563
        %p565 = pneg %p62
        %p566 = pneg %p59
        %p567 = scmp.lt.s32.totalorder %s34, 1
        %s568 = scalar_select %p567, %s34, 1
        %s569 = smul.addr %s568, 4
        %s570 = smul.addr %s569, 4
        %s571 = scalar_lea.vmem %s1, %s570
        %p572 = pneg %p88
        %p573 = pneg %p85
        %p574 = scmp.lt.s32.totalorder %s34, 1
        %s575 = scalar_select %p574, %s34, 1
        %s576 = scalar_lea.vmem %s2, %s575
        %p577 = pneg %p114
        %p578 = pneg %p111
        %p579 = scmp.lt.s32.totalorder %s34, 1
        %s580 = scalar_select %p579, %s34, 1
        %s581 = smul.addr %s580, 4
        %s582 = smul.addr %s581, 4
        %s583 = scalar_lea.vmem %s3, %s582
        %p584 = pneg %p140
        %p585 = pneg %p137
        %p586 = scmp.lt.s32.totalorder %s34, 1
        %s587 = scalar_select %p586, %s34, 1
        %s588 = scalar_lea.vmem %s4, %s587
        %p589 = pneg %p166
        %p590 = pneg %p163
        %p591 = scmp.lt.s32.totalorder %s34, 1
        %s592 = scalar_select %p591, %s34, 1
        %s593 = scalar_lea.vmem %s5, %s592
        %p594 = pneg %p192
        %p595 = pneg %p189
        %p596 = scmp.lt.s32.totalorder %s34, 1
        %s597 = scalar_select %p596, %s34, 1
        %s598 = scalar_lea.vmem %s6, %s597
        %p599 = pneg %p218
        %p600 = pneg %p215
        %p601 = scmp.lt.s32.totalorder %s34, 1
        %s602 = scalar_select %p601, %s34, 1
        %s603 = smul.addr %s602, 4
        %s604 = smul.addr %s603, 4
        %s605 = scalar_lea.vmem %s7, %s604
        %p606 = pneg %p244
        %p607 = pneg %p241
        %p608 = scmp.lt.s32.totalorder %s34, 1
        %s609 = scalar_select %p608, %s34, 1
        %s610 = scalar_lea.vmem %s8, %s609
        %p611 = pneg %p270
        %p612 = pneg %p267
        %p613 = scmp.lt.s32.totalorder %s34, 1
        %s614 = scalar_select %p613, %s34, 1
        %s615 = smul.addr %s614, 16
        %s616 = smul.addr %s615, 4
        %s617 = scalar_lea.vmem %s9, %s616
        %p618 = pneg %p296
        %p619 = pneg %p293
        %p620 = scmp.lt.s32.totalorder %s34, 1
        %s621 = scalar_select %p620, %s34, 1
        %s622 = scalar_lea.vmem %s10, %s621
        %p623 = pneg %p322
        %p624 = pneg %p319
        %p625 = scmp.lt.s32.totalorder %s34, 1
        %s626 = scalar_select %p625, %s34, 1
        %s627 = scalar_lea.vmem %s11, %s626
        %p628 = pneg %p348
        %p629 = pneg %p345
        %p630 = scmp.lt.s32.totalorder %s34, 1
        %s631 = scalar_select %p630, %s34, 1
        %s632 = scalar_lea.vmem %s12, %s631
        %p633 = pneg %p374
        %p634 = pneg %p371
        %p635 = pneg %p395
        %p636 = pneg %p392
        %p637 = pneg %p416
        %p638 = pneg %p413
        %p639 = pneg %p442
        %p640 = pneg %p439
        %s641 = sand.u32 %s429, 1
        %s642 = scalar_lea.sflag [#allocation4], %s641
        %s643 = sand.u32 %s429, 1
        %s644 = smul.addr %s643, 8
        %s645 = scalar_lea.vmem [#allocation3], %s644
        %p646 = scmp.lt.s32.totalorder %s33, 1
        %s647 = scalar_select %p646, %s33, 1
        %s648 = smul.addr %s647, 8
        %s649 = scalar_lea.vmem %s0, %s648
        %p650 = scmp.lt.s32.totalorder %s34, 1
        %s651 = scalar_select %p650, %s34, 1
        %s652 = smul.addr %s651, 4
        %s653 = smul.addr %s652, 4
        %s654 = scalar_lea.vmem %s1, %s653
        %p655 = scmp.lt.s32.totalorder %s34, 1
        %s656 = scalar_select %p655, %s34, 1
        %s657 = scalar_lea.vmem %s2, %s656
        %p658 = scmp.lt.s32.totalorder %s34, 1
        %s659 = scalar_select %p658, %s34, 1
        %s660 = smul.addr %s659, 4
        %s661 = smul.addr %s660, 4
        %s662 = scalar_lea.vmem %s3, %s661
        %p663 = scmp.lt.s32.totalorder %s34, 1
        %s664 = scalar_select %p663, %s34, 1
        %s665 = scalar_lea.vmem %s4, %s664
        %p666 = scmp.lt.s32.totalorder %s34, 1
        %s667 = scalar_select %p666, %s34, 1
        %s668 = scalar_lea.vmem %s5, %s667
        %p669 = scmp.lt.s32.totalorder %s34, 1
        %s670 = scalar_select %p669, %s34, 1
        %s671 = scalar_lea.vmem %s6, %s670
        %p672 = scmp.lt.s32.totalorder %s34, 1
        %s673 = scalar_select %p672, %s34, 1
        %s674 = smul.addr %s673, 4
        %s675 = smul.addr %s674, 4
        %s676 = scalar_lea.vmem %s7, %s675
        %p677 = scmp.lt.s32.totalorder %s34, 1
        %s678 = scalar_select %p677, %s34, 1
        %s679 = scalar_lea.vmem %s8, %s678
        %p680 = scmp.lt.s32.totalorder %s34, 1
        %s681 = scalar_select %p680, %s34, 1
        %s682 = smul.addr %s681, 16
        %s683 = smul.addr %s682, 4
        %s684 = scalar_lea.vmem %s9, %s683
        %p685 = scmp.lt.s32.totalorder %s34, 1
        %s686 = scalar_select %p685, %s34, 1
        %s687 = scalar_lea.vmem %s10, %s686
        %p688 = scmp.lt.s32.totalorder %s34, 1
        %s689 = scalar_select %p688, %s34, 1
        %s690 = scalar_lea.vmem %s11, %s689
        %p691 = scmp.lt.s32.totalorder %s34, 1
        %s692 = scalar_select %p691, %s34, 1
        %s693 = scalar_lea.vmem %s12, %s692
        %p695 = scmp.eq.s32.totalorder %s34, 0
        // Predicated region
        $region81: #{tpu_custom_call.1} parent=79 // pred_check
          %p696 = pneg %p695
        $region82: #{tpu_custom_call.1} parent=79 // pred_check_branch
          %698 = sbr.rel (%p696) target = $region84
        $region83: #{tpu_custom_call.1} parent=79 // pred_region
          %v699 = vld [vmem:[%s649] sm:$0xff]
          %vm700 = vcmask 261120
          %701 = vst.msk [vmem:[#allocation2] sm:$0xff] %vm700, %v699
        $region84: #{tpu_custom_call.1} parent=79 // pred_fallthru
          _
        %v702 = vld [vmem:[#allocation2] sm:$0xff]
        %v703 = vpack.c.bf16 %v702, %v702
        %v704 = vld [vmem:[%s654] sm:$0xf]
        %v705 = vld [vmem:[%s654 + $0x4] sm:$0xf]
        %v706 = vld [vmem:[%s654 + $0x8] sm:$0xf]
        %v707 = vld [vmem:[%s654 + $0xc] sm:$0xf]
        %v708 = vld [vmem:[%s657] sm:$0x1]
        %v710 = vlaneseq
        %v711 = vshrl.u32 %v710, 7
        %v712 = vsub.s32 0, %v711
        %v713 = vrot.slane %v708, %v712
        %v719 = vunpack.c.l.b16 %v704
        %v720 = vunpack.c.l.b16 %v705
        %v721 = vunpack.c.l.b16 %v706
        %v722 = vunpack.c.l.b16 %v707
        %v723 = vpack.c.b16 %v720, %v719
        %v724 = vpack.c.b16 %v722, %v721
        %vm727 = vcmask 261120
        %v729 = vsel %vm727, %v703, 0
        %731 = vmatprep.subr.bf16.mxu0 0
        %732 = vmatpush1.bf16.msra.mxu0 0
        %733 = vmatprep.subr.bf16.mxu0 0
        %734 = vmatpush1.bf16.msra.mxu0 0
        %735 = vmatprep.subr.bf16.mxu0 0
        %736 = vmatpush1.bf16.msra.mxu0 0
        %737 = vmatprep.subr.bf16.mxu0 0
        %738 = vmatpush1.bf16.msra.mxu0 0
        %739 = vmatprep.subr.bf16.mxu0 0
        %740 = vmatpush1.bf16.msra.mxu0 0
        %741 = vmatprep.subr.bf16.mxu0 0
        %742 = vmatpush1.bf16.msra.mxu0 0
        %743 = vmatprep.subr.bf16.mxu0 0
        %744 = vmatpush1.bf16.msra.mxu0 %v724
        %745 = vmatprep.subr.bf16.mxu0 0
        %746 = vmatpush1.bf16.msra.mxu0 %v723
        %747 = vmatprep.subr.bf16.mxu0 0
        %748 = vmatpush2.bf16.msra.mxu0 0
        %749 = vmatprep.subr.bf16.mxu0 0
        %750 = vmatpush2.bf16.msra.mxu0 0
        %751 = vmatprep.subr.bf16.mxu0 0
        %752 = vmatpush2.bf16.msra.mxu0 0
        %753 = vmatprep.subr.bf16.mxu0 0
        %754 = vmatpush2.bf16.msra.mxu0 0
        %755 = vmatprep.subr.bf16.mxu0 0
        %756 = vmatpush2.bf16.msra.mxu0 0
        %757 = vmatprep.subr.bf16.mxu0 0
        %758 = vmatpush2.bf16.msra.mxu0 0
        %759 = vmatprep.subr.bf16.mxu0 0
        %760 = vmatpush2.bf16.msra.mxu0 0
        %761 = vmatprep.subr.bf16.mxu0 0
        %762 = vmatpush2.bf16.msra.mxu0 0
        %763 = vmatprep.mubr.bf16.mxu0 0
        %764 = vmatmul.mubr.bf16.gmra.mxu0 %v729
        %v765 = vpop.f32.mrf.mxu0
        %v766 = vadd.f32 %v713, %v765
        %v767 = vpop.f32.mrf.mxu0
        %v768 = vpop.f32.mrf.mxu0
        %v769 = vpop.f32.mrf.mxu0
        %770 = vdwg.mxu0
        %v771 = vpack.c.bf16 %v766, %v766
        %773 = vrot.lane.b32.xlu0 %v771, 96
        %v774 = vpop.permute.xlu0 %773
        %vm775 = vcmask 64512
        %v777 = vsel %vm775, %v771, 0
        %v780 = vsel %vm775, %v774, 0
        %782 = vmatprep.subr.bf16.mxu0 0
        %783 = vmatpush1.bf16.xpose.msra.mxu0 0
        %784 = vmatprep.subr.bf16.mxu0 0
        %785 = vmatpush1.bf16.xpose.msra.mxu0 0
        %786 = vmatprep.subr.bf16.mxu0 0
        %787 = vmatpush1.bf16.xpose.msra.mxu0 0
        %788 = vmatprep.subr.bf16.mxu0 0
        %789 = vmatpush1.bf16.xpose.msra.mxu0 0
        %790 = vmatprep.subr.bf16.mxu0 0
        %791 = vmatpush1.bf16.xpose.msra.mxu0 0
        %792 = vmatprep.subr.bf16.mxu0 0
        %793 = vmatpush1.bf16.xpose.msra.mxu0 0
        %794 = vmatprep.subr.bf16.mxu0 0
        %795 = vmatpush1.bf16.xpose.msra.mxu0 0
        %796 = vmatprep.subr.bf16.mxu0 0
        %797 = vmatpush1.bf16.xpose.msra.mxu0 %v780
        %798 = vmatprep.subr.bf16.mxu0 0
        %799 = vmatpush2.bf16.xpose.msra.mxu0 0
        %800 = vmatprep.subr.bf16.mxu0 0
        %801 = vmatpush2.bf16.xpose.msra.mxu0 0
        %802 = vmatprep.subr.bf16.mxu0 0
        %803 = vmatpush2.bf16.xpose.msra.mxu0 0
        %804 = vmatprep.subr.bf16.mxu0 0
        %805 = vmatpush2.bf16.xpose.msra.mxu0 0
        %806 = vmatprep.subr.bf16.mxu0 0
        %807 = vmatpush2.bf16.xpose.msra.mxu0 0
        %808 = vmatprep.subr.bf16.mxu0 0
        %809 = vmatpush2.bf16.xpose.msra.mxu0 0
        %810 = vmatprep.subr.bf16.mxu0 0
        %811 = vmatpush2.bf16.xpose.msra.mxu0 0
        %812 = vmatprep.subr.bf16.mxu0 0
        %813 = vmatpush2.bf16.xpose.msra.mxu0 0
        %814 = vmatprep.mubr.bf16.mxu0 0
        %815 = vmatmul.mubr.bf16.gmra.mxu0 %v777
        %v816 = vpop.f32.mrf.mxu0
        %v817 = vadd.f32 0.0, %v816
        %v818 = vpop.f32.mrf.mxu0
        %v819 = vpop.f32.mrf.mxu0
        %v820 = vpop.f32.mrf.mxu0
        %821 = vdwg.mxu0
        %v822 = vsel %vm775, %v817, -inf
        %823 = vmax.xlane.f32.xlu0 %v822
        %v824 = vpop.xlane.xlu0 %823
        %v825 = vsub.f32 %v817, %v824
        %v826 = vmul.f32 %v825, 1.442695
        %v827 = vpow.pop %v826
        %v828 = vsel %vm775, %v827, 0.0
        %829 = vadd.xlane.f32.xlu0 %v828
        %v830 = vpop.xlane.xlu0 %829
        %v831 = vrcp.pop %v830
        %v832 = vmul.f32 %v827, %v831
        %v833 = vpack.c.bf16 %v832, %v832
        %834 = vrot.lane.b32.xlu0 %v771, 64
        %v835 = vpop.permute.xlu0 %834
        %v837 = vsel %vm775, %v833, 0
        %vm839 = vcmask 1043456
        %v841 = vsel %vm839, %v835, 0
        %843 = vmatprep.subr.bf16.mxu0 0
        %844 = vmatpush1.bf16.msra.mxu0 0
        %845 = vmatprep.subr.bf16.mxu0 0
        %846 = vmatpush1.bf16.msra.mxu0 0
        %847 = vmatprep.subr.bf16.mxu0 0
        %848 = vmatpush1.bf16.msra.mxu0 0
        %849 = vmatprep.subr.bf16.mxu0 0
        %850 = vmatpush1.bf16.msra.mxu0 0
        %851 = vmatprep.subr.bf16.mxu0 0
        %852 = vmatpush1.bf16.msra.mxu0 0
        %853 = vmatprep.subr.bf16.mxu0 0
        %854 = vmatpush1.bf16.msra.mxu0 0
        %855 = vmatprep.subr.bf16.mxu0 0
        %856 = vmatpush1.bf16.msra.mxu0 0
        %857 = vmatprep.subr.bf16.mxu0 0
        %858 = vmatpush1.bf16.msra.mxu0 %v841
        %859 = vmatprep.subr.bf16.mxu0 0
        %860 = vmatpush2.bf16.msra.mxu0 0
        %861 = vmatprep.subr.bf16.mxu0 0
        %862 = vmatpush2.bf16.msra.mxu0 0
        %863 = vmatprep.subr.bf16.mxu0 0
        %864 = vmatpush2.bf16.msra.mxu0 0
        %865 = vmatprep.subr.bf16.mxu0 0
        %866 = vmatpush2.bf16.msra.mxu0 0
        %867 = vmatprep.subr.bf16.mxu0 0
        %868 = vmatpush2.bf16.msra.mxu0 0
        %869 = vmatprep.subr.bf16.mxu0 0
        %870 = vmatpush2.bf16.msra.mxu0 0
        %871 = vmatprep.subr.bf16.mxu0 0
        %872 = vmatpush2.bf16.msra.mxu0 0
        %873 = vmatprep.subr.bf16.mxu0 0
        %874 = vmatpush2.bf16.msra.mxu0 0
        %875 = vmatprep.mubr.bf16.mxu0 0
        %876 = vmatmul.mubr.bf16.gmra.mxu0 %v837
        %v877 = vpop.f32.mrf.mxu0
        %v878 = vadd.f32 0.0, %v877
        %v879 = vpop.f32.mrf.mxu0
        %v880 = vpop.f32.mrf.mxu0
        %v881 = vpop.f32.mrf.mxu0
        %882 = vdwg.mxu0
        %v883 = vpack.c.bf16 %v878, %v878
        %v884 = vld [vmem:[%s662] sm:$0xf]
        %885 = vrot.lane.b32.xlu0 %v771, 120
        %v886 = vpop.permute.xlu0 %885
        %887 = vrot.lane.b32.xlu0 %v771, 88
        %v888 = vpop.permute.xlu0 %887
        %v890 = vsel %vm775, %v886, 0
        %v893 = vsel %vm775, %v888, 0
        %895 = vmatprep.subr.bf16.mxu0 0
        %896 = vmatpush1.bf16.xpose.msra.mxu0 0
        %897 = vmatprep.subr.bf16.mxu0 0
        %898 = vmatpush1.bf16.xpose.msra.mxu0 0
        %899 = vmatprep.subr.bf16.mxu0 0
        %900 = vmatpush1.bf16.xpose.msra.mxu0 0
        %901 = vmatprep.subr.bf16.mxu0 0
        %902 = vmatpush1.bf16.xpose.msra.mxu0 0
        %903 = vmatprep.subr.bf16.mxu0 0
        %904 = vmatpush1.bf16.xpose.msra.mxu0 0
        %905 = vmatprep.subr.bf16.mxu0 0
        %906 = vmatpush1.bf16.xpose.msra.mxu0 0
        %907 = vmatprep.subr.bf16.mxu0 0
        %908 = vmatpush1.bf16.xpose.msra.mxu0 0
        %909 = vmatprep.subr.bf16.mxu0 0
        %910 = vmatpush1.bf16.xpose.msra.mxu0 %v893
        %911 = vmatprep.subr.bf16.mxu0 0
        %912 = vmatpush2.bf16.xpose.msra.mxu0 0
        %913 = vmatprep.subr.bf16.mxu0 0
        %914 = vmatpush2.bf16.xpose.msra.mxu0 0
        %915 = vmatprep.subr.bf16.mxu0 0
        %916 = vmatpush2.bf16.xpose.msra.mxu0 0
        %917 = vmatprep.subr.bf16.mxu0 0
        %918 = vmatpush2.bf16.xpose.msra.mxu0 0
        %919 = vmatprep.subr.bf16.mxu0 0
        %920 = vmatpush2.bf16.xpose.msra.mxu0 0
        %921 = vmatprep.subr.bf16.mxu0 0
        %922 = vmatpush2.bf16.xpose.msra.mxu0 0
        %923 = vmatprep.subr.bf16.mxu0 0
        %924 = vmatpush2.bf16.xpose.msra.mxu0 0
        %925 = vmatprep.subr.bf16.mxu0 0
        %926 = vmatpush2.bf16.xpose.msra.mxu0 0
        %927 = vmatprep.mubr.bf16.mxu0 0
        %928 = vmatmul.mubr.bf16.gmra.mxu0 %v890
        %v929 = vpop.f32.mrf.mxu0
        %v930 = vadd.f32 0.0, %v929
        %v931 = vpop.f32.mrf.mxu0
        %v932 = vpop.f32.mrf.mxu0
        %v933 = vpop.f32.mrf.mxu0
        %934 = vdwg.mxu0
        %v935 = vsel %vm775, %v930, -inf
        %936 = vmax.xlane.f32.xlu0 %v935
        %v937 = vpop.xlane.xlu0 %936
        %v938 = vsub.f32 %v930, %v937
        %v939 = vmul.f32 %v938, 1.442695
        %v940 = vpow.pop %v939
        %v941 = vsel %vm775, %v940, 0.0
        %942 = vadd.xlane.f32.xlu0 %v941
        %v943 = vpop.xlane.xlu0 %942
        %v944 = vrcp.pop %v943
        %v945 = vmul.f32 %v940, %v944
        %v946 = vpack.c.bf16 %v945, %v945
        %947 = vrot.lane.b32.xlu0 %v771, 56
        %v948 = vpop.permute.xlu0 %947
        %v950 = vsel %vm775, %v946, 0
        %v953 = vsel %vm839, %v948, 0
        %955 = vmatprep.subr.bf16.mxu0 0
        %956 = vmatpush1.bf16.msra.mxu0 0
        %957 = vmatprep.subr.bf16.mxu0 0
        %958 = vmatpush1.bf16.msra.mxu0 0
        %959 = vmatprep.subr.bf16.mxu0 0
        %960 = vmatpush1.bf16.msra.mxu0 0
        %961 = vmatprep.subr.bf16.mxu0 0
        %962 = vmatpush1.bf16.msra.mxu0 0
        %963 = vmatprep.subr.bf16.mxu0 0
        %964 = vmatpush1.bf16.msra.mxu0 0
        %965 = vmatprep.subr.bf16.mxu0 0
        %966 = vmatpush1.bf16.msra.mxu0 0
        %967 = vmatprep.subr.bf16.mxu0 0
        %968 = vmatpush1.bf16.msra.mxu0 0
        %969 = vmatprep.subr.bf16.mxu0 0
        %970 = vmatpush1.bf16.msra.mxu0 %v953
        %971 = vmatprep.subr.bf16.mxu0 0
        %972 = vmatpush2.bf16.msra.mxu0 0
        %973 = vmatprep.subr.bf16.mxu0 0
        %974 = vmatpush2.bf16.msra.mxu0 0
        %975 = vmatprep.subr.bf16.mxu0 0
        %976 = vmatpush2.bf16.msra.mxu0 0
        %977 = vmatprep.subr.bf16.mxu0 0
        %978 = vmatpush2.bf16.msra.mxu0 0
        %979 = vmatprep.subr.bf16.mxu0 0
        %980 = vmatpush2.bf16.msra.mxu0 0
        %981 = vmatprep.subr.bf16.mxu0 0
        %982 = vmatpush2.bf16.msra.mxu0 0
        %983 = vmatprep.subr.bf16.mxu0 0
        %984 = vmatpush2.bf16.msra.mxu0 0
        %985 = vmatprep.subr.bf16.mxu0 0
        %986 = vmatpush2.bf16.msra.mxu0 0
        %987 = vmatprep.mubr.bf16.mxu0 0
        %988 = vmatmul.mubr.bf16.gmra.mxu0 %v950
        %v989 = vpop.f32.mrf.mxu0
        %v990 = vadd.f32 0.0, %v989
        %v991 = vpop.f32.mrf.mxu0
        %v992 = vpop.f32.mrf.mxu0
        %v993 = vpop.f32.mrf.mxu0
        %994 = vdwg.mxu0
        %v995 = vpack.c.bf16 %v990, %v990
        %v996 = vld [vmem:[%s662 + $0x4] sm:$0xf]
        %v998 = vsel %vm775, %v995, 0
        %v1001 = vsel %vm839, %v996, 0
        %1003 = vmatprep.subr.bf16.mxu0 0
        %1004 = vmatpush1.bf16.msra.mxu0 0
        %1005 = vmatprep.subr.bf16.mxu0 0
        %1006 = vmatpush1.bf16.msra.mxu0 0
        %1007 = vmatprep.subr.bf16.mxu0 0
        %1008 = vmatpush1.bf16.msra.mxu0 0
        %1009 = vmatprep.subr.bf16.mxu0 0
        %1010 = vmatpush1.bf16.msra.mxu0 0
        %1011 = vmatprep.subr.bf16.mxu0 0
        %1012 = vmatpush1.bf16.msra.mxu0 0
        %1013 = vmatprep.subr.bf16.mxu0 0
        %1014 = vmatpush1.bf16.msra.mxu0 0
        %1015 = vmatprep.subr.bf16.mxu0 0
        %1016 = vmatpush1.bf16.msra.mxu0 0
        %1017 = vmatprep.subr.bf16.mxu0 0
        %1018 = vmatpush1.bf16.msra.mxu0 %v1001
        %1019 = vmatprep.subr.bf16.mxu0 0
        %1020 = vmatpush2.bf16.msra.mxu0 0
        %1021 = vmatprep.subr.bf16.mxu0 0
        %1022 = vmatpush2.bf16.msra.mxu0 0
        %1023 = vmatprep.subr.bf16.mxu0 0
        %1024 = vmatpush2.bf16.msra.mxu0 0
        %1025 = vmatprep.subr.bf16.mxu0 0
        %1026 = vmatpush2.bf16.msra.mxu0 0
        %1027 = vmatprep.subr.bf16.mxu0 0
        %1028 = vmatpush2.bf16.msra.mxu0 0
        %1029 = vmatprep.subr.bf16.mxu0 0
        %1030 = vmatpush2.bf16.msra.mxu0 0
        %1031 = vmatprep.subr.bf16.mxu0 0
        %1032 = vmatpush2.bf16.msra.mxu0 0
        %1033 = vmatprep.subr.bf16.mxu0 0
        %1034 = vmatpush2.bf16.msra.mxu0 0
        %1035 = vmatprep.mubr.bf16.mxu0 0
        %1036 = vmatmul.mubr.bf16.gmra.mxu0 %v998
        %v1037 = vpop.f32.mrf.mxu0
        %v1038 = vadd.f32 0.0, %v1037
        %v1039 = vpop.f32.mrf.mxu0
        %v1040 = vpop.f32.mrf.mxu0
        %v1041 = vpop.f32.mrf.mxu0
        %1042 = vdwg.mxu0
        %v1044 = vsel %vm775, %v883, 0
        %v1047 = vsel %vm839, %v884, 0
        %1049 = vmatprep.subr.bf16.mxu0 0
        %1050 = vmatpush1.bf16.msra.mxu0 0
        %1051 = vmatprep.subr.bf16.mxu0 0
        %1052 = vmatpush1.bf16.msra.mxu0 0
        %1053 = vmatprep.subr.bf16.mxu0 0
        %1054 = vmatpush1.bf16.msra.mxu0 0
        %1055 = vmatprep.subr.bf16.mxu0 0
        %1056 = vmatpush1.bf16.msra.mxu0 0
        %1057 = vmatprep.subr.bf16.mxu0 0
        %1058 = vmatpush1.bf16.msra.mxu0 0
        %1059 = vmatprep.subr.bf16.mxu0 0
        %1060 = vmatpush1.bf16.msra.mxu0 0
        %1061 = vmatprep.subr.bf16.mxu0 0
        %1062 = vmatpush1.bf16.msra.mxu0 0
        %1063 = vmatprep.subr.bf16.mxu0 0
        %1064 = vmatpush1.bf16.msra.mxu0 %v1047
        %1065 = vmatprep.subr.bf16.mxu0 0
        %1066 = vmatpush2.bf16.msra.mxu0 0
        %1067 = vmatprep.subr.bf16.mxu0 0
        %1068 = vmatpush2.bf16.msra.mxu0 0
        %1069 = vmatprep.subr.bf16.mxu0 0
        %1070 = vmatpush2.bf16.msra.mxu0 0
        %1071 = vmatprep.subr.bf16.mxu0 0
        %1072 = vmatpush2.bf16.msra.mxu0 0
        %1073 = vmatprep.subr.bf16.mxu0 0
        %1074 = vmatpush2.bf16.msra.mxu0 0
        %1075 = vmatprep.subr.bf16.mxu0 0
        %1076 = vmatpush2.bf16.msra.mxu0 0
        %1077 = vmatprep.subr.bf16.mxu0 0
        %1078 = vmatpush2.bf16.msra.mxu0 0
        %1079 = vmatprep.subr.bf16.mxu0 0
        %1080 = vmatpush2.bf16.msra.mxu0 0
        %1081 = vmatprep.mubr.bf16.mxu0 0
        %1082 = vmatmul.mubr.bf16.gmra.mxu0 %v1044
        %v1083 = vpop.f32.mrf.mxu0
        %v1084 = vadd.f32 %v1038, %v1083
        %v1085 = vpop.f32.mrf.mxu0
        %v1086 = vpop.f32.mrf.mxu0
        %v1087 = vpop.f32.mrf.mxu0
        %1088 = vdwg.mxu0
        %1089 = vrot.lane.b32.xlu0 %v771, 112
        %v1090 = vpop.permute.xlu0 %1089
        %1091 = vrot.lane.b32.xlu0 %v771, 80
        %v1092 = vpop.permute.xlu0 %1091
        %v1094 = vsel %vm775, %v1090, 0
        %v1097 = vsel %vm775, %v1092, 0
        %1099 = vmatprep.subr.bf16.mxu0 0
        %1100 = vmatpush1.bf16.xpose.msra.mxu0 0
        %1101 = vmatprep.subr.bf16.mxu0 0
        %1102 = vmatpush1.bf16.xpose.msra.mxu0 0
        %1103 = vmatprep.subr.bf16.mxu0 0
        %1104 = vmatpush1.bf16.xpose.msra.mxu0 0
        %1105 = vmatprep.subr.bf16.mxu0 0
        %1106 = vmatpush1.bf16.xpose.msra.mxu0 0
        %1107 = vmatprep.subr.bf16.mxu0 0
        %1108 = vmatpush1.bf16.xpose.msra.mxu0 0
        %1109 = vmatprep.subr.bf16.mxu0 0
        %1110 = vmatpush1.bf16.xpose.msra.mxu0 0
        %1111 = vmatprep.subr.bf16.mxu0 0
        %1112 = vmatpush1.bf16.xpose.msra.mxu0 0
        %1113 = vmatprep.subr.bf16.mxu0 0
        %1114 = vmatpush1.bf16.xpose.msra.mxu0 %v1097
        %1115 = vmatprep.subr.bf16.mxu0 0
        %1116 = vmatpush2.bf16.xpose.msra.mxu0 0
        %1117 = vmatprep.subr.bf16.mxu0 0
        %1118 = vmatpush2.bf16.xpose.msra.mxu0 0
        %1119 = vmatprep.subr.bf16.mxu0 0
        %1120 = vmatpush2.bf16.xpose.msra.mxu0 0
        %1121 = vmatprep.subr.bf16.mxu0 0
        %1122 = vmatpush2.bf16.xpose.msra.mxu0 0
        %1123 = vmatprep.subr.bf16.mxu0 0
        %1124 = vmatpush2.bf16.xpose.msra.mxu0 0
        %1125 = vmatprep.subr.bf16.mxu0 0
        %1126 = vmatpush2.bf16.xpose.msra.mxu0 0
        %1127 = vmatprep.subr.bf16.mxu0 0
        %1128 = vmatpush2.bf16.xpose.msra.mxu0 0
        %1129 = vmatprep.subr.bf16.mxu0 0
        %1130 = vmatpush2.bf16.xpose.msra.mxu0 0
        %1131 = vmatprep.mubr.bf16.mxu0 0
        %1132 = vmatmul.mubr.bf16.gmra.mxu0 %v1094
        %v1133 = vpop.f32.mrf.mxu0
        %v1134 = vadd.f32 0.0, %v1133
        %v1135 = vpop.f32.mrf.mxu0
        %v1136 = vpop.f32.mrf.mxu0
        %v1137 = vpop.f32.mrf.mxu0
        %1138 = vdwg.mxu0
        %v1139 = vsel %vm775, %v1134, -inf
        %1140 = vmax.xlane.f32.xlu0 %v1139
        %v1141 = vpop.xlane.xlu0 %1140
        %v1142 = vsub.f32 %v1134, %v1141
        %v1143 = vmul.f32 %v1142, 1.442695
        %v1144 = vpow.pop %v1143
        %v1145 = vsel %vm775, %v1144, 0.0
        %1146 = vadd.xlane.f32.xlu0 %v1145
        %v1147 = vpop.xlane.xlu0 %1146
        %v1148 = vrcp.pop %v1147
        %v1149 = vmul.f32 %v1144, %v1148
        %v1150 = vpack.c.bf16 %v1149, %v1149
        %1151 = vrot.lane.b32.xlu0 %v771, 48
        %v1152 = vpop.permute.xlu0 %1151
        %v1154 = vsel %vm775, %v1150, 0
        %v1157 = vsel %vm839, %v1152, 0
        %1159 = vmatprep.subr.bf16.mxu0 0
        %1160 = vmatpush1.bf16.msra.mxu0 0
        %1161 = vmatprep.subr.bf16.mxu0 0
        %1162 = vmatpush1.bf16.msra.mxu0 0
        %1163 = vmatprep.subr.bf16.mxu0 0
        %1164 = vmatpush1.bf16.msra.mxu0 0
        %1165 = vmatprep.subr.bf16.mxu0 0
        %1166 = vmatpush1.bf16.msra.mxu0 0
        %1167 = vmatprep.subr.bf16.mxu0 0
        %1168 = vmatpush1.bf16.msra.mxu0 0
        %1169 = vmatprep.subr.bf16.mxu0 0
        %1170 = vmatpush1.bf16.msra.mxu0 0
        %1171 = vmatprep.subr.bf16.mxu0 0
        %1172 = vmatpush1.bf16.msra.mxu0 0
        %1173 = vmatprep.subr.bf16.mxu0 0
        %1174 = vmatpush1.bf16.msra.mxu0 %v1157
        %1175 = vmatprep.subr.bf16.mxu0 0
        %1176 = vmatpush2.bf16.msra.mxu0 0
        %1177 = vmatprep.subr.bf16.mxu0 0
        %1178 = vmatpush2.bf16.msra.mxu0 0
        %1179 = vmatprep.subr.bf16.mxu0 0
        %1180 = vmatpush2.bf16.msra.mxu0 0
        %1181 = vmatprep.subr.bf16.mxu0 0
        %1182 = vmatpush2.bf16.msra.mxu0 0
        %1183 = vmatprep.subr.bf16.mxu0 0
        %1184 = vmatpush2.bf16.msra.mxu0 0
        %1185 = vmatprep.subr.bf16.mxu0 0
        %1186 = vmatpush2.bf16.msra.mxu0 0
        %1187 = vmatprep.subr.bf16.mxu0 0
        %1188 = vmatpush2.bf16.msra.mxu0 0
        %1189 = vmatprep.subr.bf16.mxu0 0
        %1190 = vmatpush2.bf16.msra.mxu0 0
        %1191 = vmatprep.mubr.bf16.mxu0 0
        %1192 = vmatmul.mubr.bf16.gmra.mxu0 %v1154
        %v1193 = vpop.f32.mrf.mxu0
        %v1194 = vadd.f32 0.0, %v1193
        %v1195 = vpop.f32.mrf.mxu0
        %v1196 = vpop.f32.mrf.mxu0
        %v1197 = vpop.f32.mrf.mxu0
        %1198 = vdwg.mxu0
        %v1199 = vpack.c.bf16 %v1194, %v1194
        %v1200 = vld [vmem:[%s662 + $0x8] sm:$0xf]
        %v1202 = vsel %vm775, %v1199, 0
        %v1205 = vsel %vm839, %v1200, 0
        %1207 = vmatprep.subr.bf16.mxu0 0
        %1208 = vmatpush1.bf16.msra.mxu0 0
        %1209 = vmatprep.subr.bf16.mxu0 0
        %1210 = vmatpush1.bf16.msra.mxu0 0
        %1211 = vmatprep.subr.bf16.mxu0 0
        %1212 = vmatpush1.bf16.msra.mxu0 0
        %1213 = vmatprep.subr.bf16.mxu0 0
        %1214 = vmatpush1.bf16.msra.mxu0 0
        %1215 = vmatprep.subr.bf16.mxu0 0
        %1216 = vmatpush1.bf16.msra.mxu0 0
        %1217 = vmatprep.subr.bf16.mxu0 0
        %1218 = vmatpush1.bf16.msra.mxu0 0
        %1219 = vmatprep.subr.bf16.mxu0 0
        %1220 = vmatpush1.bf16.msra.mxu0 0
        %1221 = vmatprep.subr.bf16.mxu0 0
        %1222 = vmatpush1.bf16.msra.mxu0 %v1205
        %1223 = vmatprep.subr.bf16.mxu0 0
        %1224 = vmatpush2.bf16.msra.mxu0 0
        %1225 = vmatprep.subr.bf16.mxu0 0
        %1226 = vmatpush2.bf16.msra.mxu0 0
        %1227 = vmatprep.subr.bf16.mxu0 0
        %1228 = vmatpush2.bf16.msra.mxu0 0
        %1229 = vmatprep.subr.bf16.mxu0 0
        %1230 = vmatpush2.bf16.msra.mxu0 0
        %1231 = vmatprep.subr.bf16.mxu0 0
        %1232 = vmatpush2.bf16.msra.mxu0 0
        %1233 = vmatprep.subr.bf16.mxu0 0
        %1234 = vmatpush2.bf16.msra.mxu0 0
        %1235 = vmatprep.subr.bf16.mxu0 0
        %1236 = vmatpush2.bf16.msra.mxu0 0
        %1237 = vmatprep.subr.bf16.mxu0 0
        %1238 = vmatpush2.bf16.msra.mxu0 0
        %1239 = vmatprep.mubr.bf16.mxu0 0
        %1240 = vmatmul.mubr.bf16.gmra.mxu0 %v1202
        %v1241 = vpop.f32.mrf.mxu0
        %v1242 = vadd.f32 0.0, %v1241
        %v1243 = vpop.f32.mrf.mxu0
        %v1244 = vpop.f32.mrf.mxu0
        %v1245 = vpop.f32.mrf.mxu0
        %1246 = vdwg.mxu0
        %v1247 = vadd.f32 %v1084, %v1242
        %1248 = vrot.lane.b32.xlu0 %v771, 104
        %v1249 = vpop.permute.xlu0 %1248
        %1250 = vrot.lane.b32.xlu0 %v771, 72
        %v1251 = vpop.permute.xlu0 %1250
        %v1253 = vsel %vm775, %v1249, 0
        %v1256 = vsel %vm775, %v1251, 0
        %1258 = vmatprep.subr.bf16.mxu0 0
        %1259 = vmatpush1.bf16.xpose.msra.mxu0 0
        %1260 = vmatprep.subr.bf16.mxu0 0
        %1261 = vmatpush1.bf16.xpose.msra.mxu0 0
        %1262 = vmatprep.subr.bf16.mxu0 0
        %1263 = vmatpush1.bf16.xpose.msra.mxu0 0
        %1264 = vmatprep.subr.bf16.mxu0 0
        %1265 = vmatpush1.bf16.xpose.msra.mxu0 0
        %1266 = vmatprep.subr.bf16.mxu0 0
        %1267 = vmatpush1.bf16.xpose.msra.mxu0 0
        %1268 = vmatprep.subr.bf16.mxu0 0
        %1269 = vmatpush1.bf16.xpose.msra.mxu0 0
        %1270 = vmatprep.subr.bf16.mxu0 0
        %1271 = vmatpush1.bf16.xpose.msra.mxu0 0
        %1272 = vmatprep.subr.bf16.mxu0 0
        %1273 = vmatpush1.bf16.xpose.msra.mxu0 %v1256
        %1274 = vmatprep.subr.bf16.mxu0 0
        %1275 = vmatpush2.bf16.xpose.msra.mxu0 0
        %1276 = vmatprep.subr.bf16.mxu0 0
        %1277 = vmatpush2.bf16.xpose.msra.mxu0 0
        %1278 = vmatprep.subr.bf16.mxu0 0
        %1279 = vmatpush2.bf16.xpose.msra.mxu0 0
        %1280 = vmatprep.subr.bf16.mxu0 0
        %1281 = vmatpush2.bf16.xpose.msra.mxu0 0
        %1282 = vmatprep.subr.bf16.mxu0 0
        %1283 = vmatpush2.bf16.xpose.msra.mxu0 0
        %1284 = vmatprep.subr.bf16.mxu0 0
        %1285 = vmatpush2.bf16.xpose.msra.mxu0 0
        %1286 = vmatprep.subr.bf16.mxu0 0
        %1287 = vmatpush2.bf16.xpose.msra.mxu0 0
        %1288 = vmatprep.subr.bf16.mxu0 0
        %1289 = vmatpush2.bf16.xpose.msra.mxu0 0
        %1290 = vmatprep.mubr.bf16.mxu0 0
        %1291 = vmatmul.mubr.bf16.gmra.mxu0 %v1253
        %v1292 = vpop.f32.mrf.mxu0
        %v1293 = vadd.f32 0.0, %v1292
        %v1294 = vpop.f32.mrf.mxu0
        %v1295 = vpop.f32.mrf.mxu0
        %v1296 = vpop.f32.mrf.mxu0
        %1297 = vdwg.mxu0
        %v1298 = vsel %vm775, %v1293, -inf
        %1299 = vmax.xlane.f32.xlu0 %v1298
        %v1300 = vpop.xlane.xlu0 %1299
        %v1301 = vsub.f32 %v1293, %v1300
        %v1302 = vmul.f32 %v1301, 1.442695
        %v1303 = vpow.pop %v1302
        %v1304 = vsel %vm775, %v1303, 0.0
        %1305 = vadd.xlane.f32.xlu0 %v1304
        %v1306 = vpop.xlane.xlu0 %1305
        %v1307 = vrcp.pop %v1306
        %v1308 = vmul.f32 %v1303, %v1307
        %v1309 = vpack.c.bf16 %v1308, %v1308
        %1310 = vrot.lane.b32.xlu0 %v771, 40
        %v1311 = vpop.permute.xlu0 %1310
        %v1313 = vsel %vm775, %v1309, 0
        %v1316 = vsel %vm839, %v1311, 0
        %1318 = vmatprep.subr.bf16.mxu0 0
        %1319 = vmatpush1.bf16.msra.mxu0 0
        %1320 = vmatprep.subr.bf16.mxu0 0
        %1321 = vmatpush1.bf16.msra.mxu0 0
        %1322 = vmatprep.subr.bf16.mxu0 0
        %1323 = vmatpush1.bf16.msra.mxu0 0
        %1324 = vmatprep.subr.bf16.mxu0 0
        %1325 = vmatpush1.bf16.msra.mxu0 0
        %1326 = vmatprep.subr.bf16.mxu0 0
        %1327 = vmatpush1.bf16.msra.mxu0 0
        %1328 = vmatprep.subr.bf16.mxu0 0
        %1329 = vmatpush1.bf16.msra.mxu0 0
        %1330 = vmatprep.subr.bf16.mxu0 0
        %1331 = vmatpush1.bf16.msra.mxu0 0
        %1332 = vmatprep.subr.bf16.mxu0 0
        %1333 = vmatpush1.bf16.msra.mxu0 %v1316
        %1334 = vmatprep.subr.bf16.mxu0 0
        %1335 = vmatpush2.bf16.msra.mxu0 0
        %1336 = vmatprep.subr.bf16.mxu0 0
        %1337 = vmatpush2.bf16.msra.mxu0 0
        %1338 = vmatprep.subr.bf16.mxu0 0
        %1339 = vmatpush2.bf16.msra.mxu0 0
        %1340 = vmatprep.subr.bf16.mxu0 0
        %1341 = vmatpush2.bf16.msra.mxu0 0
        %1342 = vmatprep.subr.bf16.mxu0 0
        %1343 = vmatpush2.bf16.msra.mxu0 0
        %1344 = vmatprep.subr.bf16.mxu0 0
        %1345 = vmatpush2.bf16.msra.mxu0 0
        %1346 = vmatprep.subr.bf16.mxu0 0
        %1347 = vmatpush2.bf16.msra.mxu0 0
        %1348 = vmatprep.subr.bf16.mxu0 0
        %1349 = vmatpush2.bf16.msra.mxu0 0
        %1350 = vmatprep.mubr.bf16.mxu0 0
        %1351 = vmatmul.mubr.bf16.gmra.mxu0 %v1313
        %v1352 = vpop.f32.mrf.mxu0
        %v1353 = vadd.f32 0.0, %v1352
        %v1354 = vpop.f32.mrf.mxu0
        %v1355 = vpop.f32.mrf.mxu0
        %v1356 = vpop.f32.mrf.mxu0
        %1357 = vdwg.mxu0
        %v1358 = vpack.c.bf16 %v1353, %v1353
        %v1359 = vld [vmem:[%s662 + $0xc] sm:$0xf]
        %v1361 = vsel %vm775, %v1358, 0
        %v1364 = vsel %vm839, %v1359, 0
        %1366 = vmatprep.subr.bf16.mxu0 0
        %1367 = vmatpush1.bf16.msra.mxu0 0
        %1368 = vmatprep.subr.bf16.mxu0 0
        %1369 = vmatpush1.bf16.msra.mxu0 0
        %1370 = vmatprep.subr.bf16.mxu0 0
        %1371 = vmatpush1.bf16.msra.mxu0 0
        %1372 = vmatprep.subr.bf16.mxu0 0
        %1373 = vmatpush1.bf16.msra.mxu0 0
        %1374 = vmatprep.subr.bf16.mxu0 0
        %1375 = vmatpush1.bf16.msra.mxu0 0
        %1376 = vmatprep.subr.bf16.mxu0 0
        %1377 = vmatpush1.bf16.msra.mxu0 0
        %1378 = vmatprep.subr.bf16.mxu0 0
        %1379 = vmatpush1.bf16.msra.mxu0 0
        %1380 = vmatprep.subr.bf16.mxu0 0
        %1381 = vmatpush1.bf16.msra.mxu0 %v1364
        %1382 = vmatprep.subr.bf16.mxu0 0
        %1383 = vmatpush2.bf16.msra.mxu0 0
        %1384 = vmatprep.subr.bf16.mxu0 0
        %1385 = vmatpush2.bf16.msra.mxu0 0
        %1386 = vmatprep.subr.bf16.mxu0 0
        %1387 = vmatpush2.bf16.msra.mxu0 0
        %1388 = vmatprep.subr.bf16.mxu0 0
        %1389 = vmatpush2.bf16.msra.mxu0 0
        %1390 = vmatprep.subr.bf16.mxu0 0
        %1391 = vmatpush2.bf16.msra.mxu0 0
        %1392 = vmatprep.subr.bf16.mxu0 0
        %1393 = vmatpush2.bf16.msra.mxu0 0
        %1394 = vmatprep.subr.bf16.mxu0 0
        %1395 = vmatpush2.bf16.msra.mxu0 0
        %1396 = vmatprep.subr.bf16.mxu0 0
        %1397 = vmatpush2.bf16.msra.mxu0 0
        %1398 = vmatprep.mubr.bf16.mxu0 0
        %1399 = vmatmul.mubr.bf16.gmra.mxu0 %v1361
        %v1400 = vpop.f32.mrf.mxu0
        %v1401 = vadd.f32 0.0, %v1400
        %v1402 = vpop.f32.mrf.mxu0
        %v1403 = vpop.f32.mrf.mxu0
        %v1404 = vpop.f32.mrf.mxu0
        %1405 = vdwg.mxu0
        %v1406 = vadd.f32 %v1247, %v1401
        %v1407 = vld [vmem:[%s665] sm:$0x1]
        %v1409 = vlaneseq
        %v1410 = vshrl.u32 %v1409, 7
        %v1411 = vsub.s32 0, %v1410
        %v1412 = vrot.slane %v1407, %v1411
        %v1414 = vadd.f32 %v1406, %v1412
        %v1415 = vadd.f32 %v702, %v1414
        %v1416 = vld [vmem:[%s668] sm:$0x1]
        %v1417 = vld [vmem:[%s671] sm:$0x1]
        %v1418 = vsel %vm727, %v1415, 0.0
        %1419 = vadd.xlane.f32.xlu0 %v1418
        %v1420 = vpop.xlane.xlu0 %1419
        %v1421 = vrcp.pop 32.0
        %v1422 = vmul.f32 %v1420, %v1421
        %v1423 = vsub.f32 %v1415, %v1422
        %v1424 = vmul.f32 %v1423, %v1423
        %v1425 = vsel %vm727, %v1424, 0.0
        %1426 = vadd.xlane.f32.xlu0 %v1425
        %v1427 = vpop.xlane.xlu0 %1426
        %v1428 = vmul.f32 %v1427, %v1421
        %v1429 = vadd.f32 %v1428, 1e-05
        %v1430 = vrsqrt.pop %v1429
        %v1431 = vmul.f32 %v1423, %v1430
        %v1433 = vlaneseq
        %v1434 = vshrl.u32 %v1433, 7
        %v1435 = vsub.s32 0, %v1434
        %v1436 = vrot.slane %v1416, %v1435
        %v1438 = vmul.f32 %v1431, %v1436
        %v1440 = vlaneseq
        %v1441 = vshrl.u32 %v1440, 7
        %v1442 = vsub.s32 0, %v1441
        %v1443 = vrot.slane %v1417, %v1442
        %v1445 = vadd.f32 %v1438, %v1443
        %v1446 = vpack.c.bf16 %v1445, %v1445
        %v1447 = vld [vmem:[%s676] sm:$0xf]
        %v1448 = vld [vmem:[%s676 + $0x4] sm:$0xf]
        %v1449 = vld [vmem:[%s676 + $0x8] sm:$0xf]
        %v1450 = vld [vmem:[%s676 + $0xc] sm:$0xf]
        %v1451 = vld [vmem:[%s679] sm:$0x1]
        %v1453 = vlaneseq
        %v1454 = vshrl.u32 %v1453, 7
        %v1455 = vsub.s32 0, %v1454
        %v1456 = vrot.slane %v1451, %v1455
        %v1462 = vunpack.c.l.b16 %v1447
        %v1463 = vunpack.c.l.b16 %v1448
        %v1464 = vunpack.c.l.b16 %v1449
        %v1465 = vunpack.c.l.b16 %v1450
        %v1466 = vpack.c.b16 %v1463, %v1462
        %v1467 = vpack.c.b16 %v1465, %v1464
        %v1471 = vsel %vm727, %v1446, 0
        %1473 = vmatprep.subr.bf16.mxu0 0
        %1474 = vmatpush1.bf16.msra.mxu0 0
        %1475 = vmatprep.subr.bf16.mxu0 0
        %1476 = vmatpush1.bf16.msra.mxu0 0
        %1477 = vmatprep.subr.bf16.mxu0 0
        %1478 = vmatpush1.bf16.msra.mxu0 0
        %1479 = vmatprep.subr.bf16.mxu0 0
        %1480 = vmatpush1.bf16.msra.mxu0 0
        %1481 = vmatprep.subr.bf16.mxu0 0
        %1482 = vmatpush1.bf16.msra.mxu0 0
        %1483 = vmatprep.subr.bf16.mxu0 0
        %1484 = vmatpush1.bf16.msra.mxu0 0
        %1485 = vmatprep.subr.bf16.mxu0 0
        %1486 = vmatpush1.bf16.msra.mxu0 %v1467
        %1487 = vmatprep.subr.bf16.mxu0 0
        %1488 = vmatpush1.bf16.msra.mxu0 %v1466
        %1489 = vmatprep.subr.bf16.mxu0 0
        %1490 = vmatpush2.bf16.msra.mxu0 0
        %1491 = vmatprep.subr.bf16.mxu0 0
        %1492 = vmatpush2.bf16.msra.mxu0 0
        %1493 = vmatprep.subr.bf16.mxu0 0
        %1494 = vmatpush2.bf16.msra.mxu0 0
        %1495 = vmatprep.subr.bf16.mxu0 0
        %1496 = vmatpush2.bf16.msra.mxu0 0
        %1497 = vmatprep.subr.bf16.mxu0 0
        %1498 = vmatpush2.bf16.msra.mxu0 0
        %1499 = vmatprep.subr.bf16.mxu0 0
        %1500 = vmatpush2.bf16.msra.mxu0 0
        %1501 = vmatprep.subr.bf16.mxu0 0
        %1502 = vmatpush2.bf16.msra.mxu0 0
        %1503 = vmatprep.subr.bf16.mxu0 0
        %1504 = vmatpush2.bf16.msra.mxu0 0
        %1505 = vmatprep.mubr.bf16.mxu0 0
        %1506 = vmatmul.mubr.bf16.gmra.mxu0 %v1471
        %v1507 = vpop.f32.mrf.mxu0
        %v1508 = vadd.f32 %v1456, %v1507
        %v1509 = vpop.f32.mrf.mxu0
        %v1510 = vpop.f32.mrf.mxu0
        %v1511 = vpop.f32.mrf.mxu0
        %1512 = vdwg.mxu0
        %v1513 = vmax.f32 %v1508, 0.0
        %v1514 = vpack.c.bf16 %v1513, %v1513
        %v1515 = vld [vmem:[%s684] sm:$0xf]
        %v1516 = vld [vmem:[%s684 + $0x4] sm:$0xf]
        %v1517 = vld [vmem:[%s684 + $0x8] sm:$0xf]
        %v1518 = vld [vmem:[%s684 + $0xc] sm:$0xf]
        %v1519 = vld [vmem:[%s684 + $0x10] sm:$0xf]
        %v1520 = vld [vmem:[%s684 + $0x14] sm:$0xf]
        %v1521 = vld [vmem:[%s684 + $0x18] sm:$0xf]
        %v1522 = vld [vmem:[%s684 + $0x1c] sm:$0xf]
        %v1523 = vld [vmem:[%s684 + $0x20] sm:$0xf]
        %v1524 = vld [vmem:[%s684 + $0x24] sm:$0xf]
        %v1525 = vld [vmem:[%s684 + $0x28] sm:$0xf]
        %v1526 = vld [vmem:[%s684 + $0x2c] sm:$0xf]
        %v1527 = vld [vmem:[%s684 + $0x30] sm:$0xf]
        %v1528 = vld [vmem:[%s684 + $0x34] sm:$0xf]
        %v1529 = vld [vmem:[%s684 + $0x38] sm:$0xf]
        %v1530 = vld [vmem:[%s684 + $0x3c] sm:$0xf]
        %v1531 = vld [vmem:[%s687] sm:$0x1]
        %v1533 = vlaneseq
        %v1534 = vshrl.u32 %v1533, 7
        %v1535 = vsub.s32 0, %v1534
        %v1536 = vrot.slane %v1531, %v1535
        %v1554 = vunpack.c.l.b16 %v1515
        %v1555 = vunpack.c.l.b16 %v1516
        %v1556 = vunpack.c.l.b16 %v1517
        %v1557 = vunpack.c.l.b16 %v1518
        %v1558 = vunpack.c.l.b16 %v1519
        %v1559 = vunpack.c.l.b16 %v1520
        %v1560 = vunpack.c.l.b16 %v1521
        %v1561 = vunpack.c.l.b16 %v1522
        %v1562 = vunpack.c.l.b16 %v1523
        %v1563 = vunpack.c.l.b16 %v1524
        %v1564 = vunpack.c.l.b16 %v1525
        %v1565 = vunpack.c.l.b16 %v1526
        %v1566 = vunpack.c.l.b16 %v1527
        %v1567 = vunpack.c.l.b16 %v1528
        %v1568 = vunpack.c.l.b16 %v1529
        %v1569 = vunpack.c.l.b16 %v1530
        %v1570 = vpack.c.b16 %v1555, %v1554
        %v1571 = vpack.c.b16 %v1557, %v1556
        %v1572 = vpack.c.b16 %v1559, %v1558
        %v1573 = vpack.c.b16 %v1561, %v1560
        %v1574 = vpack.c.b16 %v1563, %v1562
        %v1575 = vpack.c.b16 %v1565, %v1564
        %v1576 = vpack.c.b16 %v1567, %v1566
        %v1577 = vpack.c.b16 %v1569, %v1568
        %1586 = vmatprep.subr.bf16.mxu0 0
        %1587 = vmatpush1.bf16.msra.mxu0 %v1577
        %1588 = vmatprep.subr.bf16.mxu0 0
        %1589 = vmatpush1.bf16.msra.mxu0 %v1576
        %1590 = vmatprep.subr.bf16.mxu0 0
        %1591 = vmatpush1.bf16.msra.mxu0 %v1575
        %1592 = vmatprep.subr.bf16.mxu0 0
        %1593 = vmatpush1.bf16.msra.mxu0 %v1574
        %1594 = vmatprep.subr.bf16.mxu0 0
        %1595 = vmatpush1.bf16.msra.mxu0 %v1573
        %1596 = vmatprep.subr.bf16.mxu0 0
        %1597 = vmatpush1.bf16.msra.mxu0 %v1572
        %1598 = vmatprep.subr.bf16.mxu0 0
        %1599 = vmatpush1.bf16.msra.mxu0 %v1571
        %1600 = vmatprep.subr.bf16.mxu0 0
        %1601 = vmatpush1.bf16.msra.mxu0 %v1570
        %1602 = vmatprep.subr.bf16.mxu0 0
        %1603 = vmatpush2.bf16.msra.mxu0 0
        %1604 = vmatprep.subr.bf16.mxu0 0
        %1605 = vmatpush2.bf16.msra.mxu0 0
        %1606 = vmatprep.subr.bf16.mxu0 0
        %1607 = vmatpush2.bf16.msra.mxu0 0
        %1608 = vmatprep.subr.bf16.mxu0 0
        %1609 = vmatpush2.bf16.msra.mxu0 0
        %1610 = vmatprep.subr.bf16.mxu0 0
        %1611 = vmatpush2.bf16.msra.mxu0 0
        %1612 = vmatprep.subr.bf16.mxu0 0
        %1613 = vmatpush2.bf16.msra.mxu0 0
        %1614 = vmatprep.subr.bf16.mxu0 0
        %1615 = vmatpush2.bf16.msra.mxu0 0
        %1616 = vmatprep.subr.bf16.mxu0 0
        %1617 = vmatpush2.bf16.msra.mxu0 0
        %1618 = vmatprep.mubr.bf16.mxu0 0
        %1619 = vmatmul.mubr.bf16.gmra.mxu0 %v1514
        %v1620 = vpop.f32.mrf.mxu0
        %v1621 = vadd.f32 %v1536, %v1620
        %v1622 = vpop.f32.mrf.mxu0
        %v1623 = vpop.f32.mrf.mxu0
        %v1624 = vpop.f32.mrf.mxu0
        %1625 = vdwg.mxu0
        %v1626 = vadd.f32 %v1445, %v1621
        %v1627 = vld [vmem:[%s690] sm:$0x1]
        %v1628 = vld [vmem:[%s693] sm:$0x1]
        %v1629 = vsel %vm727, %v1626, 0.0
        %1630 = vadd.xlane.f32.xlu0 %v1629
        %v1631 = vpop.xlane.xlu0 %1630
        %v1632 = vmul.f32 %v1631, %v1421
        %v1633 = vsub.f32 %v1626, %v1632
        %v1634 = vmul.f32 %v1633, %v1633
        %v1635 = vsel %vm727, %v1634, 0.0
        %1636 = vadd.xlane.f32.xlu0 %v1635
        %v1637 = vpop.xlane.xlu0 %1636
        %v1638 = vmul.f32 %v1637, %v1421
        %v1639 = vadd.f32 %v1638, 1e-05
        %v1640 = vrsqrt.pop %v1639
        %v1641 = vmul.f32 %v1633, %v1640
        %v1643 = vlaneseq
        %v1644 = vshrl.u32 %v1643, 7
        %v1645 = vsub.s32 0, %v1644
        %v1646 = vrot.slane %v1627, %v1645
        %v1648 = vmul.f32 %v1641, %v1646
        %v1650 = vlaneseq
        %v1651 = vshrl.u32 %v1650, 7
        %v1652 = vsub.s32 0, %v1651
        %v1653 = vrot.slane %v1628, %v1652
        %v1655 = vadd.f32 %v1648, %v1653
        %1656 = vst.msk [vmem:[#allocation2] sm:$0xff] %vm727, %v1655
        %p1657 = scmp.eq.s32.totalorder %s34, 1
        // Predicated region
        $region85: #{tpu_custom_call.1} parent=79 // pred_check
          %p1658 = pneg %p1657
        $region86: #{tpu_custom_call.1} parent=79 // pred_check_branch
          %1660 = sbr.rel (%p1658) target = $region88
        $region87: #{tpu_custom_call.1} parent=79 // pred_region
          %v1661 = vpack.c.bf16 %v1655, %v1655
          %v1662 = vld [vmem:[%s13] sm:$0xf]
          %v1663 = vld [vmem:[%s13 + $0x4] sm:$0xf]
          %v1664 = vld [vmem:[%s13 + $0x8] sm:$0xf]
          %v1665 = vld [vmem:[%s13 + $0xc] sm:$0xf]
          %v1666 = vld [vmem:[%s14] sm:$0x1]
          %v1668 = vlaneseq
          %v1669 = vshrl.u32 %v1668, 7
          %v1670 = vsub.s32 0, %v1669
          %v1671 = vrot.slane %v1666, %v1670
          %v1677 = vunpack.c.l.b16 %v1662
          %v1678 = vunpack.c.l.b16 %v1663
          %v1679 = vunpack.c.l.b16 %v1664
          %v1680 = vunpack.c.l.b16 %v1665
          %v1681 = vpack.c.b16 %v1678, %v1677
          %v1682 = vpack.c.b16 %v1680, %v1679
          %v1686 = vsel %vm727, %v1661, 0
          %1688 = vmatprep.subr.bf16.mxu0 0
          %1689 = vmatpush1.bf16.msra.mxu0 0
          %1690 = vmatprep.subr.bf16.mxu0 0
          %1691 = vmatpush1.bf16.msra.mxu0 0
          %1692 = vmatprep.subr.bf16.mxu0 0
          %1693 = vmatpush1.bf16.msra.mxu0 0
          %1694 = vmatprep.subr.bf16.mxu0 0
          %1695 = vmatpush1.bf16.msra.mxu0 0
          %1696 = vmatprep.subr.bf16.mxu0 0
          %1697 = vmatpush1.bf16.msra.mxu0 0
          %1698 = vmatprep.subr.bf16.mxu0 0
          %1699 = vmatpush1.bf16.msra.mxu0 0
          %1700 = vmatprep.subr.bf16.mxu0 0
          %1701 = vmatpush1.bf16.msra.mxu0 %v1682
          %1702 = vmatprep.subr.bf16.mxu0 0
          %1703 = vmatpush1.bf16.msra.mxu0 %v1681
          %1704 = vmatprep.subr.bf16.mxu0 0
          %1705 = vmatpush2.bf16.msra.mxu0 0
          %1706 = vmatprep.subr.bf16.mxu0 0
          %1707 = vmatpush2.bf16.msra.mxu0 0
          %1708 = vmatprep.subr.bf16.mxu0 0
          %1709 = vmatpush2.bf16.msra.mxu0 0
          %1710 = vmatprep.subr.bf16.mxu0 0
          %1711 = vmatpush2.bf16.msra.mxu0 0
          %1712 = vmatprep.subr.bf16.mxu0 0
          %1713 = vmatpush2.bf16.msra.mxu0 0
          %1714 = vmatprep.subr.bf16.mxu0 0
          %1715 = vmatpush2.bf16.msra.mxu0 0
          %1716 = vmatprep.subr.bf16.mxu0 0
          %1717 = vmatpush2.bf16.msra.mxu0 0
          %1718 = vmatprep.subr.bf16.mxu0 0
          %1719 = vmatpush2.bf16.msra.mxu0 0
          %1720 = vmatprep.mubr.bf16.mxu0 0
          %1721 = vmatmul.mubr.bf16.gmra.mxu0 %v1686
          %v1722 = vpop.f32.mrf.mxu0
          %v1723 = vadd.f32 %v1671, %v1722
          %v1724 = vpop.f32.mrf.mxu0
          %v1725 = vpop.f32.mrf.mxu0
          %v1726 = vpop.f32.mrf.mxu0
          %1727 = vdwg.mxu0
          %1728 = vst.msk [vmem:[%s645] sm:$0xff] %vm727, %v1723
        $region88: #{tpu_custom_call.1} parent=79 // pred_fallthru
          _
        %s1729 = sand.u32 %s429, 1
        %s1730 = scalar_lea.sflag [#allocation4], %s1729
        %s1731 = sand.u32 %s429, 1
        %s1732 = smul.addr %s1731, 8
        %s1733 = scalar_lea.vmem [#allocation3], %s1732
        // Predicated region
        $region89: #{tpu_custom_call.1} parent=79 // pred_check
          %p1734 = pneg %p439
        $region90: #{tpu_custom_call.1} parent=79 // pred_check_branch
          %1736 = sbr.rel (%p1734) target = $region92
        $region91: #{tpu_custom_call.1} parent=79 // pred_region
          %s1738 = ssub.s32 128, 128
          %1739 = vsyncadd %s1730, %s1738
          %s1740 = smul.addr %s33, 128
          %s1741 = scalar_lea.hbm %s15, %s1740
          %s1743 = sshll.u32 %s1733, 4
          %s1744 = int_to_ptr.vmem [resolvable:$true] %s1743
          %1746 = dma.vmem_to_hbm [thread:$0]  %s1744, 128, %s1741, %s1730
        $region92: #{tpu_custom_call.1} parent=79 // pred_fallthru
          _
      $region80: #{tpu_custom_call.1} parent=5 // pred_fallthru
        _
      %p1747 = scmp.le.s32.totalorder 2, %s24
      // Predicated region
      $region93: #{tpu_custom_call.1} parent=5 // pred_check
        %p1748 = pneg %p1747
      $region94: #{tpu_custom_call.1} parent=5 // pred_check_branch
        %1750 = sbr.rel (%p1748) target = $region96
      $region95: #{tpu_custom_call.1} parent=5 // pred_region
        %s1751 = ssub.s32 %s24, 2
        // Predicated region
        $region97: #{tpu_custom_call.1} parent=95 // pred_check
          %p1752 = pneg %p445
        $region98: #{tpu_custom_call.1} parent=95 // pred_check_branch
          %1754 = sbr.rel (%p1752) target = $region100
        $region99: #{tpu_custom_call.1} parent=95 // pred_region
          %s1755 = sand.u32 %s430, 1
          %s1756 = scalar_lea.sflag [#allocation4], %s1755
          %s1757 = sand.u32 %s430, 1
          %s1758 = smul.addr %s1757, 8
          %s1759 = scalar_lea.vmem [#allocation3], %s1758
          %1760 = dma.done %s1756, 128
        $region100: #{tpu_custom_call.1} parent=95 // pred_fallthru
          _
      $region96: #{tpu_custom_call.1} parent=5 // pred_fallthru
        _
    $region6: #{tpu_custom_call.1} parent=1 // loop_footer
      %s28 = sadd.s32 1, %s24
    $region7: #{tpu_custom_call.1} parent=1 // loop_footer_branch
      %23 = sbr.rel target = $region3
    $region8: #{tpu_custom_call.1} parent=1 // loop_exit
      _
    %1761 = vsyncpa [#allocation4], 1
    %s1762 = scalar_lea.sflag [#allocation4], 1
    %1763 = vsyncpa %s1762, 1

</llo_original>
